<compile_context>
chip_gen: v6e
topology: v6e:2x2x1
jax: 0.10.0
libtpu: 0.0.40
codegen_flags: <defaults>
</compile_context>

<pallas_src>
import math

import jax
import jax.numpy as jnp
from jax.experimental import pallas as pl
from jax.experimental.pallas import tpu as pltpu

_HIGHEST = jax.lax.Precision.HIGHEST


# ----------------------------------------------------------------------------
# Pallas kernel: recurrence only — h@wh + LSTM gating, Tc steps per grid step.
# ----------------------------------------------------------------------------
def _recurrence_kernel(
    gates_ref,                 # (Tc, B, 4H)  precomputed static gates for this chunk
    h0_ref, c0_ref,            # (B, H)       initial state
    wh_ref,                    # (H, 4H)      recurrent weights (VMEM-resident)
    h_out_ref,                 # (Tc, B, H)   h sequence block for this chunk
    c_last_ref,                # (B, H)       final c only (constant index_map)
    h_scr, c_scr,              # VMEM scratch: carried h/c state
):
    Tc = gates_ref.shape[0]
    H = h_scr.shape[-1]

    @pl.when(pl.program_id(0) == 0)
    def _():
        h_scr[...] = h0_ref[...]
        c_scr[...] = c0_ref[...]

    # Statically unrolled chunk of the recurrence (all indices stay static).
    for s in range(Tc):
        gates = gates_ref[s] + jnp.dot(
            h_scr[...], wh_ref[...], preferred_element_type=jnp.float32
        )
        i_g = gates[:, 0 * H:1 * H]
        f_g = gates[:, 1 * H:2 * H]
        g_g = gates[:, 2 * H:3 * H]
        o_g = gates[:, 3 * H:4 * H]
        c_new = jax.nn.sigmoid(f_g) * c_scr[...] + jax.nn.sigmoid(i_g) * jnp.tanh(g_g)
        h_new = jax.nn.sigmoid(o_g) * jnp.tanh(c_new)
        h_scr[...] = h_new
        c_scr[...] = c_new
        h_out_ref[s] = h_new

    c_last_ref[...] = c_scr[...]   # constant index_map -> flushed to HBM once


def _largest_chunk(T, cap=16):
    """Largest divisor of T that is <= cap (timesteps per grid step)."""
    for tc in range(min(T, cap), 0, -1):
        if T % tc == 0:
            return tc
    return 1


def _run_layer(qa_gates, inputs, ping_tb, wl, wr, wh, h0, c0):
    """One SQAPCILSTMCell layer over the whole sequence."""
    T, B, F = inputs.shape
    H = h0.shape[-1]

    # ---- hoisted pre-pass: "refactoring" gather + all static gate matmuls ----
    t_idx = jnp.arange(T, dtype=jnp.int32)[:, None]                  # (T, 1)
    valid = jnp.logical_and(t_idx > 0, ping_tb > 0)                  # (T, B)
    safe = jnp.where(valid, ping_tb - 1, 0)                          # (T, B)
    left = inputs[safe, jnp.arange(B, dtype=jnp.int32)[None, :], :]  # (T, B, F)
    left = jnp.where(valid[:, :, None], left, 0.0)
    lr = jnp.concatenate([left, inputs], axis=-1)                    # (T, B, 2F)
    w_lr = jnp.concatenate([wl, wr], axis=0)                         # (2F, 4H)
    gates_static = (
        jnp.einsum("tbf,fg->tbg", lr, w_lr, precision=_HIGHEST)
        + qa_gates[None, :, :]
    ).astype(jnp.float32)                                            # (T, B, 4H)

    Tc = _largest_chunk(T)
    n_chunks = T // Tc

    grid_spec = pltpu.PrefetchScalarGridSpec(
        num_scalar_prefetch=0,
        grid=(n_chunks,),
        in_specs=[
            pl.BlockSpec((Tc, B, 4 * H), lambda i: (i, 0, 0)),
            pl.BlockSpec((B, H), lambda i: (0, 0)),
            pl.BlockSpec((B, H), lambda i: (0, 0)),
            pl.BlockSpec((H, 4 * H), lambda i: (0, 0)),
        ],
        out_specs=[
            pl.BlockSpec((Tc, B, H), lambda i: (i, 0, 0)),
            pl.BlockSpec((B, H), lambda i: (0, 0)),
        ],
        scratch_shapes=[
            pltpu.VMEM((B, H), jnp.float32),
            pltpu.VMEM((B, H), jnp.float32),
        ],
    )

    h_seq, c_last = pl.pallas_call(
        _recurrence_kernel,
        out_shape=(
            jax.ShapeDtypeStruct((T, B, H), jnp.float32),
            jax.ShapeDtypeStruct((B, H), jnp.float32),
        ),
        grid_spec=grid_spec,
        compiler_params=pltpu.CompilerParams(
            dimension_semantics=("arbitrary",)),  # time recurrence: never parallel
    )(gates_static, h0, c0, wh)

    return h_seq, c_last


# ----------------------------------------------------------------------------
# Full module forward (batch_first=False, is_peephole=False).
# ----------------------------------------------------------------------------
def sqapci_lstm_forward(question, answer, x, ping, init_states, layer_params):
    # TODO(synk): is_peephole=True in-place gate zeroing not implemented (default False).
    q = question[0]                         # (B, question_size)
    a = answer[0]                           # (B, answer_size)
    h0_all, c0_all = init_states            # (L, B, H) each
    ping_tb = ping.T.astype(jnp.int32)      # (T, B)

    inputs = x
    h_last, c_last = [], []
    for i, p in enumerate(layer_params):
        bias = (p["bq"] + p["ba"] + p["bl"] + p["br"] + p["bh"]).reshape(1, -1)
        qa_gates = (
            jnp.dot(q, p["wq"], precision=_HIGHEST)
            + jnp.dot(a, p["wa"], precision=_HIGHEST)
            + bias
        )                                    # (B, 4H), time-invariant
        h_seq, c_fin = _run_layer(
            qa_gates, inputs, ping_tb,
            p["wl"], p["wr"], p["wh"], h0_all[i], c0_all[i],
        )
        inputs = h_seq
        h_last.append(h_seq[-1])
        c_last.append(c_fin)

    out_seq = inputs                        # self.h[:, -1]  -> (T, B, H)
    h_n = jnp.stack(h_last)                 # self.h[-1]     -> (L, B, H)
    c_n = jnp.stack(c_last)                 # self.c[-1]     -> (L, B, H)
    return out_seq, (h_n, c_n)


# ----------------------------------------------------------------------------
# Pure-JAX reference (mirrors the PyTorch code) for validation.
# ----------------------------------------------------------------------------
def reference_forward(question, answer, x, ping, init_states, layer_params):
    hp = _HIGHEST
    q = question[0]
    a = answer[0]
    h0_all, c0_all = init_states
    T, B, _ = x.shape
    inputs = x
    h_all, c_all = [], []
    for p in layer_params:
        h_t, c_t = h0_all[len(h_all)], c0_all[len(c_all)]
        hs, cs = [], []
        H = h_t.shape[-1]
        for t in range(T):
            left = jnp.zeros_like(inputs[t])
            if t:
                for b in range(B):
                    pv = int(ping[b, t])
                    if pv:
                        left = left.at[b].set(inputs[pv - 1, b])
            right = inputs[t]
            gates = (
                jnp.dot(q, p["wq"], precision=hp) + p["bq"]
                + jnp.dot(a, p["wa"], precision=hp) + p["ba"]
                + jnp.dot(left, p["wl"], precision=hp) + p["bl"]
                + jnp.dot(right, p["wr"], precision=hp) + p["br"]
                + jnp.dot(h_t, p["wh"], precision=hp) + p["bh"]
            )
            i_g, f_g, g_g, o_g = (gates[:, k * H:(k + 1) * H] for k in range(4))
            c_t = jax.nn.sigmoid(f_g) * c_t + jax.nn.sigmoid(i_g) * jnp.tanh(g_g)
            h_t = jax.nn.sigmoid(o_g) * jnp.tanh(c_t)
            hs.append(h_t)
            cs.append(c_t)
        h_seq, c_seq = jnp.stack(hs), jnp.stack(cs)
        inputs = h_seq
        h_all.append(h_seq)
        c_all.append(c_seq)
    h_n = jnp.stack([h[-1] for h in h_all])
    c_n = jnp.stack([c[-1] for c in c_all])
    return h_all[-1], (h_n, c_n)


# ----------------------------------------------------------------------------
# Deterministic parameter init (uniform(-stdv, stdv), stdv = 1/sqrt(H)).
# ----------------------------------------------------------------------------
def init_layer_params(key, q_size, a_size, l_size, r_size, h_size):
    stdv = 1.0 / math.sqrt(h_size)
    shapes = {
        "wq": (q_size, 4 * h_size), "wa": (a_size, 4 * h_size),
        "wl": (l_size, 4 * h_size), "wr": (r_size, 4 * h_size),
        "wh": (h_size, 4 * h_size),
        "bq": (4 * h_size,), "ba": (4 * h_size,), "bl": (4 * h_size,),
        "br": (4 * h_size,), "bh": (4 * h_size,),
    }
    keys = jax.random.split(key, len(shapes))
    return {
        name: jax.random.uniform(k, shape, jnp.float32, -stdv, stdv)
        for (name, shape), k in zip(shapes.items(), keys)
    }


if __name__ == "__main__":
    # Small shapes consistent with the module.
    T, B = 8, 2
    Q_SIZE, A_SIZE, IN_SIZE, HIDDEN = 16, 16, 16, 32
    NUM_LAYERS = 2

    root = jax.random.PRNGKey(0)
    k_q, k_a, k_x, k_p, k_h, k_c, k_w = jax.random.split(root, 7)

    question = jax.random.normal(k_q, (1, B, Q_SIZE), jnp.float32)
    answer = jax.random.normal(k_a, (1, B, A_SIZE), jnp.float32)
    x = jax.random.normal(k_x, (T, B, IN_SIZE), jnp.float32)
    ping = jax.random.randint(k_p, (B, T), 0, T, jnp.int32)   # 0 => no left input
    h0 = 0.1 * jax.random.normal(k_h, (NUM_LAYERS, B, HIDDEN), jnp.float32)
    c0 = 0.1 * jax.random.normal(k_c, (NUM_LAYERS, B, HIDDEN), jnp.float32)

    layer_keys = jax.random.split(k_w, NUM_LAYERS)
    layer_params = [
        init_layer_params(layer_keys[0], Q_SIZE, A_SIZE, IN_SIZE, IN_SIZE, HIDDEN)
    ]
    for i in range(1, NUM_LAYERS):
        layer_params.append(
            init_layer_params(layer_keys[i], Q_SIZE, A_SIZE, HIDDEN, HIDDEN, HIDDEN)
        )

    fwd = jax.jit(sqapci_lstm_forward)
    out_seq, (h_n, c_n) = fwd(question, answer, x, ping, (h0, c0), layer_params)
    jax.block_until_ready((out_seq, h_n, c_n))

    ref_seq, (ref_h, ref_c) = reference_forward(
        question, answer, x, ping, (h0, c0), layer_params
    )
    err = max(
        float(jnp.max(jnp.abs(out_seq - ref_seq))),
        float(jnp.max(jnp.abs(h_n - ref_h))),
        float(jnp.max(jnp.abs(c_n - ref_c))),
    )
    assert out_seq.shape == (T, B, HIDDEN)
    assert h_n.shape == (NUM_LAYERS, B, HIDDEN) and c_n.shape == (NUM_LAYERS, B, HIDDEN)
    assert err < 1e-3, f"max abs error vs reference: {err}"
    print("KERNEL_OK")
</pallas_src>

<mosaic_0001>
module attributes {stable_mosaic.version = 11 : i64} {
  func.func @_recurrence_kernel(%arg0: i32, %arg1: memref<8x2x128xf32, #tpu.memory_space<vmem>>, %arg2: memref<2x32xf32, #tpu.memory_space<vmem>>, %arg3: memref<2x32xf32, #tpu.memory_space<vmem>>, %arg4: memref<32x128xf32, #tpu.memory_space<vmem>>, %arg5: memref<8x2x32xf32, #tpu.memory_space<vmem>>, %arg6: memref<2x32xf32, #tpu.memory_space<vmem>>, %arg7: memref<2x32xf32, #tpu.memory_space<vmem>>, %arg8: memref<2x32xf32, #tpu.memory_space<vmem>>) attributes {dimension_semantics = [#tpu.dimension_semantics<arbitrary>], iteration_bounds = array<i64: 1>, scalar_prefetch = 0 : i64, scratch_operands = 2 : i64, tpu.core_type = #tpu.core_type<tc>, window_params = [{transform_indices = @transform_0, window_bounds = array<i64: 8, 2, 128>}, {pipeline_mode = #tpu.pipeline_mode<synchronous>, transform_indices = @transform_1, window_bounds = array<i64: 2, 32>}, {pipeline_mode = #tpu.pipeline_mode<synchronous>, transform_indices = @transform_2, window_bounds = array<i64: 2, 32>}, {pipeline_mode = #tpu.pipeline_mode<synchronous>, transform_indices = @transform_3, window_bounds = array<i64: 32, 128>}, {transform_indices = @transform_4, window_bounds = array<i64: 8, 2, 32>}, {pipeline_mode = #tpu.pipeline_mode<synchronous>, transform_indices = @transform_5, window_bounds = array<i64: 2, 32>}]} {
    %c0_i32 = arith.constant 0 : i32
    %0 = arith.cmpi eq, %arg0, %c0_i32 : i32
    %1 = arith.extui %0 : i1 to i32
    %c0_i32_0 = arith.constant 0 : i32
    %2 = arith.cmpi ne, %1, %c0_i32_0 : i32
    scf.if %2 {
      %c0_156 = arith.constant 0 : index
      %c0_157 = arith.constant 0 : index
      %301 = vector.load %arg2[%c0_156, %c0_157] : memref<2x32xf32, #tpu.memory_space<vmem>>, vector<2x32xf32>
      %c0_158 = arith.constant 0 : index
      %c0_159 = arith.constant 0 : index
      %302 = vector.load %arg7[%c0_158, %c0_159] : memref<2x32xf32, #tpu.memory_space<vmem>>, vector<2x32xf32>
      tpu.vector_store %arg7[%c0_158, %c0_159], %301 {strides = array<i32>} : memref<2x32xf32, #tpu.memory_space<vmem>>, vector<2x32xf32>,
      %c0_160 = arith.constant 0 : index
      %c0_161 = arith.constant 0 : index
      %303 = vector.load %arg3[%c0_160, %c0_161] : memref<2x32xf32, #tpu.memory_space<vmem>>, vector<2x32xf32>
      %c0_162 = arith.constant 0 : index
      %c0_163 = arith.constant 0 : index
      %304 = vector.load %arg8[%c0_162, %c0_163] : memref<2x32xf32, #tpu.memory_space<vmem>>, vector<2x32xf32>
      tpu.vector_store %arg8[%c0_162, %c0_163], %303 {strides = array<i32>} : memref<2x32xf32, #tpu.memory_space<vmem>>, vector<2x32xf32>,
    } else {
    }
    %c0 = arith.constant 0 : index
    %c0_1 = arith.constant 0 : index
    %c0_2 = arith.constant 0 : index
    %3 = vector.load %arg1[%c0, %c0_1, %c0_2] : memref<8x2x128xf32, #tpu.memory_space<vmem>>, vector<1x2x128xf32>
    %4 = vector.shape_cast %3 : vector<1x2x128xf32> to vector<2x128xf32>
    %c0_3 = arith.constant 0 : index
    %c0_4 = arith.constant 0 : index
    %5 = vector.load %arg7[%c0_3, %c0_4] : memref<2x32xf32, #tpu.memory_space<vmem>>, vector<2x32xf32>
    %c0_5 = arith.constant 0 : index
    %c0_6 = arith.constant 0 : index
    %6 = vector.load %arg4[%c0_5, %c0_6] : memref<32x128xf32, #tpu.memory_space<vmem>>, vector<32x128xf32>
    %cst = arith.constant dense<0.000000e+00> : vector<2x128xf32>
    %7 = tpu.matmul %5, %6, %cst {dimension_numbers = #tpu.dot_dimension_numbers<[1], [0], [0], [1], [0, 0, 1, 1], [], []>} : vector<2x32xf32>, vector<32x128xf32>, vector<2x128xf32> -> vector<2x128xf32>
    %8 = arith.addf %4, %7 : vector<2x128xf32>
    %9 = vector.extract_strided_slice %8 {offsets = [0, 0], sizes = [2, 32], strides = [1, 1]} : vector<2x128xf32> to vector<2x32xf32>
    %10 = vector.extract_strided_slice %8 {offsets = [0, 32], sizes = [2, 32], strides = [1, 1]} : vector<2x128xf32> to vector<2x32xf32>
    %11 = vector.extract_strided_slice %8 {offsets = [0, 64], sizes = [2, 32], strides = [1, 1]} : vector<2x128xf32> to vector<2x32xf32>
    %12 = vector.extract_strided_slice %8 {offsets = [0, 96], sizes = [2, 32], strides = [1, 1]} : vector<2x128xf32> to vector<2x32xf32>
    %13 = arith.negf %10 : vector<2x32xf32>
    %14 = math.exp %13 : vector<2x32xf32>
    %cst_7 = arith.constant 1.000000e+00 : f32
    %15 = vector.broadcast %cst_7 : f32 to vector<2x32xf32>
    %16 = arith.addf %15, %14 : vector<2x32xf32>
    %17 = arith.divf %15, %16 : vector<2x32xf32>
    %c0_8 = arith.constant 0 : index
    %c0_9 = arith.constant 0 : index
    %18 = vector.load %arg8[%c0_8, %c0_9] : memref<2x32xf32, #tpu.memory_space<vmem>>, vector<2x32xf32>
    %19 = arith.mulf %17, %18 : vector<2x32xf32>
    %20 = arith.negf %9 : vector<2x32xf32>
    %21 = math.exp %20 : vector<2x32xf32>
    %cst_10 = arith.constant 1.000000e+00 : f32
    %22 = vector.broadcast %cst_10 : f32 to vector<2x32xf32>
    %23 = arith.addf %22, %21 : vector<2x32xf32>
    %24 = arith.divf %22, %23 : vector<2x32xf32>
    %25 = math.tanh %11 : vector<2x32xf32>
    %26 = arith.mulf %24, %25 : vector<2x32xf32>
    %27 = arith.addf %19, %26 : vector<2x32xf32>
    %28 = arith.negf %12 : vector<2x32xf32>
    %29 = math.exp %28 : vector<2x32xf32>
    %cst_11 = arith.constant 1.000000e+00 : f32
    %30 = vector.broadcast %cst_11 : f32 to vector<2x32xf32>
    %31 = arith.addf %30, %29 : vector<2x32xf32>
    %32 = arith.divf %30, %31 : vector<2x32xf32>
    %33 = math.tanh %27 : vector<2x32xf32>
    %34 = arith.mulf %32, %33 : vector<2x32xf32>
    %c0_12 = arith.constant 0 : index
    %c0_13 = arith.constant 0 : index
    %35 = vector.load %arg7[%c0_12, %c0_13] : memref<2x32xf32, #tpu.memory_space<vmem>>, vector<2x32xf32>
    tpu.vector_store %arg7[%c0_12, %c0_13], %34 {strides = array<i32>} : memref<2x32xf32, #tpu.memory_space<vmem>>, vector<2x32xf32>,
    %c0_14 = arith.constant 0 : index
    %c0_15 = arith.constant 0 : index
    %36 = vector.load %arg8[%c0_14, %c0_15] : memref<2x32xf32, #tpu.memory_space<vmem>>, vector<2x32xf32>
    tpu.vector_store %arg8[%c0_14, %c0_15], %27 {strides = array<i32>} : memref<2x32xf32, #tpu.memory_space<vmem>>, vector<2x32xf32>,
    %c0_16 = arith.constant 0 : index
    %c0_17 = arith.constant 0 : index
    %c0_18 = arith.constant 0 : index
    %37 = vector.load %arg5[%c0_16, %c0_17, %c0_18] : memref<8x2x32xf32, #tpu.memory_space<vmem>>, vector<1x2x32xf32>
    %38 = vector.shape_cast %37 : vector<1x2x32xf32> to vector<2x32xf32>
    %39 = vector.shape_cast %34 : vector<2x32xf32> to vector<1x2x32xf32>
    tpu.vector_store %arg5[%c0_16, %c0_17, %c0_18], %39 {strides = array<i32>} : memref<8x2x32xf32, #tpu.memory_space<vmem>>, vector<1x2x32xf32>,
    %c1 = arith.constant 1 : index
    %c0_19 = arith.constant 0 : index
    %c0_20 = arith.constant 0 : index
    %40 = vector.load %arg1[%c1, %c0_19, %c0_20] : memref<8x2x128xf32, #tpu.memory_space<vmem>>, vector<1x2x128xf32>
    %41 = vector.shape_cast %40 : vector<1x2x128xf32> to vector<2x128xf32>
    %c0_21 = arith.constant 0 : index
    %c0_22 = arith.constant 0 : index
    %42 = vector.load %arg7[%c0_21, %c0_22] : memref<2x32xf32, #tpu.memory_space<vmem>>, vector<2x32xf32>
    %c0_23 = arith.constant 0 : index
    %c0_24 = arith.constant 0 : index
    %43 = vector.load %arg4[%c0_23, %c0_24] : memref<32x128xf32, #tpu.memory_space<vmem>>, vector<32x128xf32>
    %cst_25 = arith.constant dense<0.000000e+00> : vector<2x128xf32>
    %44 = tpu.matmul %42, %43, %cst_25 {dimension_numbers = #tpu.dot_dimension_numbers<[1], [0], [0], [1], [0, 0, 1, 1], [], []>} : vector<2x32xf32>, vector<32x128xf32>, vector<2x128xf32> -> vector<2x128xf32>
    %45 = arith.addf %41, %44 : vector<2x128xf32>
    %46 = vector.extract_strided_slice %45 {offsets = [0, 0], sizes = [2, 32], strides = [1, 1]} : vector<2x128xf32> to vector<2x32xf32>
    %47 = vector.extract_strided_slice %45 {offsets = [0, 32], sizes = [2, 32], strides = [1, 1]} : vector<2x128xf32> to vector<2x32xf32>
    %48 = vector.extract_strided_slice %45 {offsets = [0, 64], sizes = [2, 32], strides = [1, 1]} : vector<2x128xf32> to vector<2x32xf32>
    %49 = vector.extract_strided_slice %45 {offsets = [0, 96], sizes = [2, 32], strides = [1, 1]} : vector<2x128xf32> to vector<2x32xf32>
    %50 = arith.negf %47 : vector<2x32xf32>
    %51 = math.exp %50 : vector<2x32xf32>
    %cst_26 = arith.constant 1.000000e+00 : f32
    %52 = vector.broadcast %cst_26 : f32 to vector<2x32xf32>
    %53 = arith.addf %52, %51 : vector<2x32xf32>
    %54 = arith.divf %52, %53 : vector<2x32xf32>
    %c0_27 = arith.constant 0 : index
    %c0_28 = arith.constant 0 : index
    %55 = vector.load %arg8[%c0_27, %c0_28] : memref<2x32xf32, #tpu.memory_space<vmem>>, vector<2x32xf32>
    %56 = arith.mulf %54, %55 : vector<2x32xf32>
    %57 = arith.negf %46 : vector<2x32xf32>
    %58 = math.exp %57 : vector<2x32xf32>
    %cst_29 = arith.constant 1.000000e+00 : f32
    %59 = vector.broadcast %cst_29 : f32 to vector<2x32xf32>
    %60 = arith.addf %59, %58 : vector<2x32xf32>
    %61 = arith.divf %59, %60 : vector<2x32xf32>
    %62 = math.tanh %48 : vector<2x32xf32>
    %63 = arith.mulf %61, %62 : vector<2x32xf32>
    %64 = arith.addf %56, %63 : vector<2x32xf32>
    %65 = arith.negf %49 : vector<2x32xf32>
    %66 = math.exp %65 : vector<2x32xf32>
    %cst_30 = arith.constant 1.000000e+00 : f32
    %67 = vector.broadcast %cst_30 : f32 to vector<2x32xf32>
    %68 = arith.addf %67, %66 : vector<2x32xf32>
    %69 = arith.divf %67, %68 : vector<2x32xf32>
    %70 = math.tanh %64 : vector<2x32xf32>
    %71 = arith.mulf %69, %70 : vector<2x32xf32>
    %c0_31 = arith.constant 0 : index
    %c0_32 = arith.constant 0 : index
    %72 = vector.load %arg7[%c0_31, %c0_32] : memref<2x32xf32, #tpu.memory_space<vmem>>, vector<2x32xf32>
    tpu.vector_store %arg7[%c0_31, %c0_32], %71 {strides = array<i32>} : memref<2x32xf32, #tpu.memory_space<vmem>>, vector<2x32xf32>,
    %c0_33 = arith.constant 0 : index
    %c0_34 = arith.constant 0 : index
    %73 = vector.load %arg8[%c0_33, %c0_34] : memref<2x32xf32, #tpu.memory_space<vmem>>, vector<2x32xf32>
    tpu.vector_store %arg8[%c0_33, %c0_34], %64 {strides = array<i32>} : memref<2x32xf32, #tpu.memory_space<vmem>>, vector<2x32xf32>,
    %c1_35 = arith.constant 1 : index
    %c0_36 = arith.constant 0 : index
    %c0_37 = arith.constant 0 : index
    %74 = vector.load %arg5[%c1_35, %c0_36, %c0_37] : memref<8x2x32xf32, #tpu.memory_space<vmem>>, vector<1x2x32xf32>
    %75 = vector.shape_cast %74 : vector<1x2x32xf32> to vector<2x32xf32>
    %76 = vector.shape_cast %71 : vector<2x32xf32> to vector<1x2x32xf32>
    tpu.vector_store %arg5[%c1_35, %c0_36, %c0_37], %76 {strides = array<i32>} : memref<8x2x32xf32, #tpu.memory_space<vmem>>, vector<1x2x32xf32>,
    %c2 = arith.constant 2 : index
    %c0_38 = arith.constant 0 : index
    %c0_39 = arith.constant 0 : index
    %77 = vector.load %arg1[%c2, %c0_38, %c0_39] : memref<8x2x128xf32, #tpu.memory_space<vmem>>, vector<1x2x128xf32>
    %78 = vector.shape_cast %77 : vector<1x2x128xf32> to vector<2x128xf32>
    %c0_40 = arith.constant 0 : index
    %c0_41 = arith.constant 0 : index
    %79 = vector.load %arg7[%c0_40, %c0_41] : memref<2x32xf32, #tpu.memory_space<vmem>>, vector<2x32xf32>
    %c0_42 = arith.constant 0 : index
    %c0_43 = arith.constant 0 : index
    %80 = vector.load %arg4[%c0_42, %c0_43] : memref<32x128xf32, #tpu.memory_space<vmem>>, vector<32x128xf32>
    %cst_44 = arith.constant dense<0.000000e+00> : vector<2x128xf32>
    %81 = tpu.matmul %79, %80, %cst_44 {dimension_numbers = #tpu.dot_dimension_numbers<[1], [0], [0], [1], [0, 0, 1, 1], [], []>} : vector<2x32xf32>, vector<32x128xf32>, vector<2x128xf32> -> vector<2x128xf32>
    %82 = arith.addf %78, %81 : vector<2x128xf32>
    %83 = vector.extract_strided_slice %82 {offsets = [0, 0], sizes = [2, 32], strides = [1, 1]} : vector<2x128xf32> to vector<2x32xf32>
    %84 = vector.extract_strided_slice %82 {offsets = [0, 32], sizes = [2, 32], strides = [1, 1]} : vector<2x128xf32> to vector<2x32xf32>
    %85 = vector.extract_strided_slice %82 {offsets = [0, 64], sizes = [2, 32], strides = [1, 1]} : vector<2x128xf32> to vector<2x32xf32>
    %86 = vector.extract_strided_slice %82 {offsets = [0, 96], sizes = [2, 32], strides = [1, 1]} : vector<2x128xf32> to vector<2x32xf32>
    %87 = arith.negf %84 : vector<2x32xf32>
    %88 = math.exp %87 : vector<2x32xf32>
    %cst_45 = arith.constant 1.000000e+00 : f32
    %89 = vector.broadcast %cst_45 : f32 to vector<2x32xf32>
    %90 = arith.addf %89, %88 : vector<2x32xf32>
    %91 = arith.divf %89, %90 : vector<2x32xf32>
    %c0_46 = arith.constant 0 : index
    %c0_47 = arith.constant 0 : index
    %92 = vector.load %arg8[%c0_46, %c0_47] : memref<2x32xf32, #tpu.memory_space<vmem>>, vector<2x32xf32>
    %93 = arith.mulf %91, %92 : vector<2x32xf32>
    %94 = arith.negf %83 : vector<2x32xf32>
    %95 = math.exp %94 : vector<2x32xf32>
    %cst_48 = arith.constant 1.000000e+00 : f32
    %96 = vector.broadcast %cst_48 : f32 to vector<2x32xf32>
    %97 = arith.addf %96, %95 : vector<2x32xf32>
    %98 = arith.divf %96, %97 : vector<2x32xf32>
    %99 = math.tanh %85 : vector<2x32xf32>
    %100 = arith.mulf %98, %99 : vector<2x32xf32>
    %101 = arith.addf %93, %100 : vector<2x32xf32>
    %102 = arith.negf %86 : vector<2x32xf32>
    %103 = math.exp %102 : vector<2x32xf32>
    %cst_49 = arith.constant 1.000000e+00 : f32
    %104 = vector.broadcast %cst_49 : f32 to vector<2x32xf32>
    %105 = arith.addf %104, %103 : vector<2x32xf32>
    %106 = arith.divf %104, %105 : vector<2x32xf32>
    %107 = math.tanh %101 : vector<2x32xf32>
    %108 = arith.mulf %106, %107 : vector<2x32xf32>
    %c0_50 = arith.constant 0 : index
    %c0_51 = arith.constant 0 : index
    %109 = vector.load %arg7[%c0_50, %c0_51] : memref<2x32xf32, #tpu.memory_space<vmem>>, vector<2x32xf32>
    tpu.vector_store %arg7[%c0_50, %c0_51], %108 {strides = array<i32>} : memref<2x32xf32, #tpu.memory_space<vmem>>, vector<2x32xf32>,
    %c0_52 = arith.constant 0 : index
    %c0_53 = arith.constant 0 : index
    %110 = vector.load %arg8[%c0_52, %c0_53] : memref<2x32xf32, #tpu.memory_space<vmem>>, vector<2x32xf32>
    tpu.vector_store %arg8[%c0_52, %c0_53], %101 {strides = array<i32>} : memref<2x32xf32, #tpu.memory_space<vmem>>, vector<2x32xf32>,
    %c2_54 = arith.constant 2 : index
    %c0_55 = arith.constant 0 : index
    %c0_56 = arith.constant 0 : index
    %111 = vector.load %arg5[%c2_54, %c0_55, %c0_56] : memref<8x2x32xf32, #tpu.memory_space<vmem>>, vector<1x2x32xf32>
    %112 = vector.shape_cast %111 : vector<1x2x32xf32> to vector<2x32xf32>
    %113 = vector.shape_cast %108 : vector<2x32xf32> to vector<1x2x32xf32>
    tpu.vector_store %arg5[%c2_54, %c0_55, %c0_56], %113 {strides = array<i32>} : memref<8x2x32xf32, #tpu.memory_space<vmem>>, vector<1x2x32xf32>,
    %c3 = arith.constant 3 : index
    %c0_57 = arith.constant 0 : index
    %c0_58 = arith.constant 0 : index
    %114 = vector.load %arg1[%c3, %c0_57, %c0_58] : memref<8x2x128xf32, #tpu.memory_space<vmem>>, vector<1x2x128xf32>
    %115 = vector.shape_cast %114 : vector<1x2x128xf32> to vector<2x128xf32>
    %c0_59 = arith.constant 0 : index
    %c0_60 = arith.constant 0 : index
    %116 = vector.load %arg7[%c0_59, %c0_60] : memref<2x32xf32, #tpu.memory_space<vmem>>, vector<2x32xf32>
    %c0_61 = arith.constant 0 : index
    %c0_62 = arith.constant 0 : index
    %117 = vector.load %arg4[%c0_61, %c0_62] : memref<32x128xf32, #tpu.memory_space<vmem>>, vector<32x128xf32>
    %cst_63 = arith.constant dense<0.000000e+00> : vector<2x128xf32>
    %118 = tpu.matmul %116, %117, %cst_63 {dimension_numbers = #tpu.dot_dimension_numbers<[1], [0], [0], [1], [0, 0, 1, 1], [], []>} : vector<2x32xf32>, vector<32x128xf32>, vector<2x128xf32> -> vector<2x128xf32>
    %119 = arith.addf %115, %118 : vector<2x128xf32>
    %120 = vector.extract_strided_slice %119 {offsets = [0, 0], sizes = [2, 32], strides = [1, 1]} : vector<2x128xf32> to vector<2x32xf32>
    %121 = vector.extract_strided_slice %119 {offsets = [0, 32], sizes = [2, 32], strides = [1, 1]} : vector<2x128xf32> to vector<2x32xf32>
    %122 = vector.extract_strided_slice %119 {offsets = [0, 64], sizes = [2, 32], strides = [1, 1]} : vector<2x128xf32> to vector<2x32xf32>
    %123 = vector.extract_strided_slice %119 {offsets = [0, 96], sizes = [2, 32], strides = [1, 1]} : vector<2x128xf32> to vector<2x32xf32>
    %124 = arith.negf %121 : vector<2x32xf32>
    %125 = math.exp %124 : vector<2x32xf32>
    %cst_64 = arith.constant 1.000000e+00 : f32
    %126 = vector.broadcast %cst_64 : f32 to vector<2x32xf32>
    %127 = arith.addf %126, %125 : vector<2x32xf32>
    %128 = arith.divf %126, %127 : vector<2x32xf32>
    %c0_65 = arith.constant 0 : index
    %c0_66 = arith.constant 0 : index
    %129 = vector.load %arg8[%c0_65, %c0_66] : memref<2x32xf32, #tpu.memory_space<vmem>>, vector<2x32xf32>
    %130 = arith.mulf %128, %129 : vector<2x32xf32>
    %131 = arith.negf %120 : vector<2x32xf32>
    %132 = math.exp %131 : vector<2x32xf32>
    %cst_67 = arith.constant 1.000000e+00 : f32
    %133 = vector.broadcast %cst_67 : f32 to vector<2x32xf32>
    %134 = arith.addf %133, %132 : vector<2x32xf32>
    %135 = arith.divf %133, %134 : vector<2x32xf32>
    %136 = math.tanh %122 : vector<2x32xf32>
    %137 = arith.mulf %135, %136 : vector<2x32xf32>
    %138 = arith.addf %130, %137 : vector<2x32xf32>
    %139 = arith.negf %123 : vector<2x32xf32>
    %140 = math.exp %139 : vector<2x32xf32>
    %cst_68 = arith.constant 1.000000e+00 : f32
    %141 = vector.broadcast %cst_68 : f32 to vector<2x32xf32>
    %142 = arith.addf %141, %140 : vector<2x32xf32>
    %143 = arith.divf %141, %142 : vector<2x32xf32>
    %144 = math.tanh %138 : vector<2x32xf32>
    %145 = arith.mulf %143, %144 : vector<2x32xf32>
    %c0_69 = arith.constant 0 : index
    %c0_70 = arith.constant 0 : index
    %146 = vector.load %arg7[%c0_69, %c0_70] : memref<2x32xf32, #tpu.memory_space<vmem>>, vector<2x32xf32>
    tpu.vector_store %arg7[%c0_69, %c0_70], %145 {strides = array<i32>} : memref<2x32xf32, #tpu.memory_space<vmem>>, vector<2x32xf32>,
    %c0_71 = arith.constant 0 : index
    %c0_72 = arith.constant 0 : index
    %147 = vector.load %arg8[%c0_71, %c0_72] : memref<2x32xf32, #tpu.memory_space<vmem>>, vector<2x32xf32>
    tpu.vector_store %arg8[%c0_71, %c0_72], %138 {strides = array<i32>} : memref<2x32xf32, #tpu.memory_space<vmem>>, vector<2x32xf32>,
    %c3_73 = arith.constant 3 : index
    %c0_74 = arith.constant 0 : index
    %c0_75 = arith.constant 0 : index
    %148 = vector.load %arg5[%c3_73, %c0_74, %c0_75] : memref<8x2x32xf32, #tpu.memory_space<vmem>>, vector<1x2x32xf32>
    %149 = vector.shape_cast %148 : vector<1x2x32xf32> to vector<2x32xf32>
    %150 = vector.shape_cast %145 : vector<2x32xf32> to vector<1x2x32xf32>
    tpu.vector_store %arg5[%c3_73, %c0_74, %c0_75], %150 {strides = array<i32>} : memref<8x2x32xf32, #tpu.memory_space<vmem>>, vector<1x2x32xf32>,
    %c4 = arith.constant 4 : index
    %c0_76 = arith.constant 0 : index
    %c0_77 = arith.constant 0 : index
    %151 = vector.load %arg1[%c4, %c0_76, %c0_77] : memref<8x2x128xf32, #tpu.memory_space<vmem>>, vector<1x2x128xf32>
    %152 = vector.shape_cast %151 : vector<1x2x128xf32> to vector<2x128xf32>
    %c0_78 = arith.constant 0 : index
    %c0_79 = arith.constant 0 : index
    %153 = vector.load %arg7[%c0_78, %c0_79] : memref<2x32xf32, #tpu.memory_space<vmem>>, vector<2x32xf32>
    %c0_80 = arith.constant 0 : index
    %c0_81 = arith.constant 0 : index
    %154 = vector.load %arg4[%c0_80, %c0_81] : memref<32x128xf32, #tpu.memory_space<vmem>>, vector<32x128xf32>
    %cst_82 = arith.constant dense<0.000000e+00> : vector<2x128xf32>
    %155 = tpu.matmul %153, %154, %cst_82 {dimension_numbers = #tpu.dot_dimension_numbers<[1], [0], [0], [1], [0, 0, 1, 1], [], []>} : vector<2x32xf32>, vector<32x128xf32>, vector<2x128xf32> -> vector<2x128xf32>
    %156 = arith.addf %152, %155 : vector<2x128xf32>
    %157 = vector.extract_strided_slice %156 {offsets = [0, 0], sizes = [2, 32], strides = [1, 1]} : vector<2x128xf32> to vector<2x32xf32>
    %158 = vector.extract_strided_slice %156 {offsets = [0, 32], sizes = [2, 32], strides = [1, 1]} : vector<2x128xf32> to vector<2x32xf32>
    %159 = vector.extract_strided_slice %156 {offsets = [0, 64], sizes = [2, 32], strides = [1, 1]} : vector<2x128xf32> to vector<2x32xf32>
    %160 = vector.extract_strided_slice %156 {offsets = [0, 96], sizes = [2, 32], strides = [1, 1]} : vector<2x128xf32> to vector<2x32xf32>
    %161 = arith.negf %158 : vector<2x32xf32>
    %162 = math.exp %161 : vector<2x32xf32>
    %cst_83 = arith.constant 1.000000e+00 : f32
    %163 = vector.broadcast %cst_83 : f32 to vector<2x32xf32>
    %164 = arith.addf %163, %162 : vector<2x32xf32>
    %165 = arith.divf %163, %164 : vector<2x32xf32>
    %c0_84 = arith.constant 0 : index
    %c0_85 = arith.constant 0 : index
    %166 = vector.load %arg8[%c0_84, %c0_85] : memref<2x32xf32, #tpu.memory_space<vmem>>, vector<2x32xf32>
    %167 = arith.mulf %165, %166 : vector<2x32xf32>
    %168 = arith.negf %157 : vector<2x32xf32>
    %169 = math.exp %168 : vector<2x32xf32>
    %cst_86 = arith.constant 1.000000e+00 : f32
    %170 = vector.broadcast %cst_86 : f32 to vector<2x32xf32>
    %171 = arith.addf %170, %169 : vector<2x32xf32>
    %172 = arith.divf %170, %171 : vector<2x32xf32>
    %173 = math.tanh %159 : vector<2x32xf32>
    %174 = arith.mulf %172, %173 : vector<2x32xf32>
    %175 = arith.addf %167, %174 : vector<2x32xf32>
    %176 = arith.negf %160 : vector<2x32xf32>
    %177 = math.exp %176 : vector<2x32xf32>
    %cst_87 = arith.constant 1.000000e+00 : f32
    %178 = vector.broadcast %cst_87 : f32 to vector<2x32xf32>
    %179 = arith.addf %178, %177 : vector<2x32xf32>
    %180 = arith.divf %178, %179 : vector<2x32xf32>
    %181 = math.tanh %175 : vector<2x32xf32>
    %182 = arith.mulf %180, %181 : vector<2x32xf32>
    %c0_88 = arith.constant 0 : index
    %c0_89 = arith.constant 0 : index
    %183 = vector.load %arg7[%c0_88, %c0_89] : memref<2x32xf32, #tpu.memory_space<vmem>>, vector<2x32xf32>
    tpu.vector_store %arg7[%c0_88, %c0_89], %182 {strides = array<i32>} : memref<2x32xf32, #tpu.memory_space<vmem>>, vector<2x32xf32>,
    %c0_90 = arith.constant 0 : index
    %c0_91 = arith.constant 0 : index
    %184 = vector.load %arg8[%c0_90, %c0_91] : memref<2x32xf32, #tpu.memory_space<vmem>>, vector<2x32xf32>
    tpu.vector_store %arg8[%c0_90, %c0_91], %175 {strides = array<i32>} : memref<2x32xf32, #tpu.memory_space<vmem>>, vector<2x32xf32>,
    %c4_92 = arith.constant 4 : index
    %c0_93 = arith.constant 0 : index
    %c0_94 = arith.constant 0 : index
    %185 = vector.load %arg5[%c4_92, %c0_93, %c0_94] : memref<8x2x32xf32, #tpu.memory_space<vmem>>, vector<1x2x32xf32>
    %186 = vector.shape_cast %185 : vector<1x2x32xf32> to vector<2x32xf32>
    %187 = vector.shape_cast %182 : vector<2x32xf32> to vector<1x2x32xf32>
    tpu.vector_store %arg5[%c4_92, %c0_93, %c0_94], %187 {strides = array<i32>} : memref<8x2x32xf32, #tpu.memory_space<vmem>>, vector<1x2x32xf32>,
    %c5 = arith.constant 5 : index
    %c0_95 = arith.constant 0 : index
    %c0_96 = arith.constant 0 : index
    %188 = vector.load %arg1[%c5, %c0_95, %c0_96] : memref<8x2x128xf32, #tpu.memory_space<vmem>>, vector<1x2x128xf32>
    %189 = vector.shape_cast %188 : vector<1x2x128xf32> to vector<2x128xf32>
    %c0_97 = arith.constant 0 : index
    %c0_98 = arith.constant 0 : index
    %190 = vector.load %arg7[%c0_97, %c0_98] : memref<2x32xf32, #tpu.memory_space<vmem>>, vector<2x32xf32>
    %c0_99 = arith.constant 0 : index
    %c0_100 = arith.constant 0 : index
    %191 = vector.load %arg4[%c0_99, %c0_100] : memref<32x128xf32, #tpu.memory_space<vmem>>, vector<32x128xf32>
    %cst_101 = arith.constant dense<0.000000e+00> : vector<2x128xf32>
    %192 = tpu.matmul %190, %191, %cst_101 {dimension_numbers = #tpu.dot_dimension_numbers<[1], [0], [0], [1], [0, 0, 1, 1], [], []>} : vector<2x32xf32>, vector<32x128xf32>, vector<2x128xf32> -> vector<2x128xf32>
    %193 = arith.addf %189, %192 : vector<2x128xf32>
    %194 = vector.extract_strided_slice %193 {offsets = [0, 0], sizes = [2, 32], strides = [1, 1]} : vector<2x128xf32> to vector<2x32xf32>
    %195 = vector.extract_strided_slice %193 {offsets = [0, 32], sizes = [2, 32], strides = [1, 1]} : vector<2x128xf32> to vector<2x32xf32>
    %196 = vector.extract_strided_slice %193 {offsets = [0, 64], sizes = [2, 32], strides = [1, 1]} : vector<2x128xf32> to vector<2x32xf32>
    %197 = vector.extract_strided_slice %193 {offsets = [0, 96], sizes = [2, 32], strides = [1, 1]} : vector<2x128xf32> to vector<2x32xf32>
    %198 = arith.negf %195 : vector<2x32xf32>
    %199 = math.exp %198 : vector<2x32xf32>
    %cst_102 = arith.constant 1.000000e+00 : f32
    %200 = vector.broadcast %cst_102 : f32 to vector<2x32xf32>
    %201 = arith.addf %200, %199 : vector<2x32xf32>
    %202 = arith.divf %200, %201 : vector<2x32xf32>
    %c0_103 = arith.constant 0 : index
    %c0_104 = arith.constant 0 : index
    %203 = vector.load %arg8[%c0_103, %c0_104] : memref<2x32xf32, #tpu.memory_space<vmem>>, vector<2x32xf32>
    %204 = arith.mulf %202, %203 : vector<2x32xf32>
    %205 = arith.negf %194 : vector<2x32xf32>
    %206 = math.exp %205 : vector<2x32xf32>
    %cst_105 = arith.constant 1.000000e+00 : f32
    %207 = vector.broadcast %cst_105 : f32 to vector<2x32xf32>
    %208 = arith.addf %207, %206 : vector<2x32xf32>
    %209 = arith.divf %207, %208 : vector<2x32xf32>
    %210 = math.tanh %196 : vector<2x32xf32>
    %211 = arith.mulf %209, %210 : vector<2x32xf32>
    %212 = arith.addf %204, %211 : vector<2x32xf32>
    %213 = arith.negf %197 : vector<2x32xf32>
    %214 = math.exp %213 : vector<2x32xf32>
    %cst_106 = arith.constant 1.000000e+00 : f32
    %215 = vector.broadcast %cst_106 : f32 to vector<2x32xf32>
    %216 = arith.addf %215, %214 : vector<2x32xf32>
    %217 = arith.divf %215, %216 : vector<2x32xf32>
    %218 = math.tanh %212 : vector<2x32xf32>
    %219 = arith.mulf %217, %218 : vector<2x32xf32>
    %c0_107 = arith.constant 0 : index
    %c0_108 = arith.constant 0 : index
    %220 = vector.load %arg7[%c0_107, %c0_108] : memref<2x32xf32, #tpu.memory_space<vmem>>, vector<2x32xf32>
    tpu.vector_store %arg7[%c0_107, %c0_108], %219 {strides = array<i32>} : memref<2x32xf32, #tpu.memory_space<vmem>>, vector<2x32xf32>,
    %c0_109 = arith.constant 0 : index
    %c0_110 = arith.constant 0 : index
    %221 = vector.load %arg8[%c0_109, %c0_110] : memref<2x32xf32, #tpu.memory_space<vmem>>, vector<2x32xf32>
    tpu.vector_store %arg8[%c0_109, %c0_110], %212 {strides = array<i32>} : memref<2x32xf32, #tpu.memory_space<vmem>>, vector<2x32xf32>,
    %c5_111 = arith.constant 5 : index
    %c0_112 = arith.constant 0 : index
    %c0_113 = arith.constant 0 : index
    %222 = vector.load %arg5[%c5_111, %c0_112, %c0_113] : memref<8x2x32xf32, #tpu.memory_space<vmem>>, vector<1x2x32xf32>
    %223 = vector.shape_cast %222 : vector<1x2x32xf32> to vector<2x32xf32>
    %224 = vector.shape_cast %219 : vector<2x32xf32> to vector<1x2x32xf32>
    tpu.vector_store %arg5[%c5_111, %c0_112, %c0_113], %224 {strides = array<i32>} : memref<8x2x32xf32, #tpu.memory_space<vmem>>, vector<1x2x32xf32>,
    %c6 = arith.constant 6 : index
    %c0_114 = arith.constant 0 : index
    %c0_115 = arith.constant 0 : index
    %225 = vector.load %arg1[%c6, %c0_114, %c0_115] : memref<8x2x128xf32, #tpu.memory_space<vmem>>, vector<1x2x128xf32>
    %226 = vector.shape_cast %225 : vector<1x2x128xf32> to vector<2x128xf32>
    %c0_116 = arith.constant 0 : index
    %c0_117 = arith.constant 0 : index
    %227 = vector.load %arg7[%c0_116, %c0_117] : memref<2x32xf32, #tpu.memory_space<vmem>>, vector<2x32xf32>
    %c0_118 = arith.constant 0 : index
    %c0_119 = arith.constant 0 : index
    %228 = vector.load %arg4[%c0_118, %c0_119] : memref<32x128xf32, #tpu.memory_space<vmem>>, vector<32x128xf32>
    %cst_120 = arith.constant dense<0.000000e+00> : vector<2x128xf32>
    %229 = tpu.matmul %227, %228, %cst_120 {dimension_numbers = #tpu.dot_dimension_numbers<[1], [0], [0], [1], [0, 0, 1, 1], [], []>} : vector<2x32xf32>, vector<32x128xf32>, vector<2x128xf32> -> vector<2x128xf32>
    %230 = arith.addf %226, %229 : vector<2x128xf32>
    %231 = vector.extract_strided_slice %230 {offsets = [0, 0], sizes = [2, 32], strides = [1, 1]} : vector<2x128xf32> to vector<2x32xf32>
    %232 = vector.extract_strided_slice %230 {offsets = [0, 32], sizes = [2, 32], strides = [1, 1]} : vector<2x128xf32> to vector<2x32xf32>
    %233 = vector.extract_strided_slice %230 {offsets = [0, 64], sizes = [2, 32], strides = [1, 1]} : vector<2x128xf32> to vector<2x32xf32>
    %234 = vector.extract_strided_slice %230 {offsets = [0, 96], sizes = [2, 32], strides = [1, 1]} : vector<2x128xf32> to vector<2x32xf32>
    %235 = arith.negf %232 : vector<2x32xf32>
    %236 = math.exp %235 : vector<2x32xf32>
    %cst_121 = arith.constant 1.000000e+00 : f32
    %237 = vector.broadcast %cst_121 : f32 to vector<2x32xf32>
    %238 = arith.addf %237, %236 : vector<2x32xf32>
    %239 = arith.divf %237, %238 : vector<2x32xf32>
    %c0_122 = arith.constant 0 : index
    %c0_123 = arith.constant 0 : index
    %240 = vector.load %arg8[%c0_122, %c0_123] : memref<2x32xf32, #tpu.memory_space<vmem>>, vector<2x32xf32>
    %241 = arith.mulf %239, %240 : vector<2x32xf32>
    %242 = arith.negf %231 : vector<2x32xf32>
    %243 = math.exp %242 : vector<2x32xf32>
    %cst_124 = arith.constant 1.000000e+00 : f32
    %244 = vector.broadcast %cst_124 : f32 to vector<2x32xf32>
    %245 = arith.addf %244, %243 : vector<2x32xf32>
    %246 = arith.divf %244, %245 : vector<2x32xf32>
    %247 = math.tanh %233 : vector<2x32xf32>
    %248 = arith.mulf %246, %247 : vector<2x32xf32>
    %249 = arith.addf %241, %248 : vector<2x32xf32>
    %250 = arith.negf %234 : vector<2x32xf32>
    %251 = math.exp %250 : vector<2x32xf32>
    %cst_125 = arith.constant 1.000000e+00 : f32
    %252 = vector.broadcast %cst_125 : f32 to vector<2x32xf32>
    %253 = arith.addf %252, %251 : vector<2x32xf32>
    %254 = arith.divf %252, %253 : vector<2x32xf32>
    %255 = math.tanh %249 : vector<2x32xf32>
    %256 = arith.mulf %254, %255 : vector<2x32xf32>
    %c0_126 = arith.constant 0 : index
    %c0_127 = arith.constant 0 : index
    %257 = vector.load %arg7[%c0_126, %c0_127] : memref<2x32xf32, #tpu.memory_space<vmem>>, vector<2x32xf32>
    tpu.vector_store %arg7[%c0_126, %c0_127], %256 {strides = array<i32>} : memref<2x32xf32, #tpu.memory_space<vmem>>, vector<2x32xf32>,
    %c0_128 = arith.constant 0 : index
    %c0_129 = arith.constant 0 : index
    %258 = vector.load %arg8[%c0_128, %c0_129] : memref<2x32xf32, #tpu.memory_space<vmem>>, vector<2x32xf32>
    tpu.vector_store %arg8[%c0_128, %c0_129], %249 {strides = array<i32>} : memref<2x32xf32, #tpu.memory_space<vmem>>, vector<2x32xf32>,
    %c6_130 = arith.constant 6 : index
    %c0_131 = arith.constant 0 : index
    %c0_132 = arith.constant 0 : index
    %259 = vector.load %arg5[%c6_130, %c0_131, %c0_132] : memref<8x2x32xf32, #tpu.memory_space<vmem>>, vector<1x2x32xf32>
    %260 = vector.shape_cast %259 : vector<1x2x32xf32> to vector<2x32xf32>
    %261 = vector.shape_cast %256 : vector<2x32xf32> to vector<1x2x32xf32>
    tpu.vector_store %arg5[%c6_130, %c0_131, %c0_132], %261 {strides = array<i32>} : memref<8x2x32xf32, #tpu.memory_space<vmem>>, vector<1x2x32xf32>,
    %c7 = arith.constant 7 : index
    %c0_133 = arith.constant 0 : index
    %c0_134 = arith.constant 0 : index
    %262 = vector.load %arg1[%c7, %c0_133, %c0_134] : memref<8x2x128xf32, #tpu.memory_space<vmem>>, vector<1x2x128xf32>
    %263 = vector.shape_cast %262 : vector<1x2x128xf32> to vector<2x128xf32>
    %c0_135 = arith.constant 0 : index
    %c0_136 = arith.constant 0 : index
    %264 = vector.load %arg7[%c0_135, %c0_136] : memref<2x32xf32, #tpu.memory_space<vmem>>, vector<2x32xf32>
    %c0_137 = arith.constant 0 : index
    %c0_138 = arith.constant 0 : index
    %265 = vector.load %arg4[%c0_137, %c0_138] : memref<32x128xf32, #tpu.memory_space<vmem>>, vector<32x128xf32>
    %cst_139 = arith.constant dense<0.000000e+00> : vector<2x128xf32>
    %266 = tpu.matmul %264, %265, %cst_139 {dimension_numbers = #tpu.dot_dimension_numbers<[1], [0], [0], [1], [0, 0, 1, 1], [], []>} : vector<2x32xf32>, vector<32x128xf32>, vector<2x128xf32> -> vector<2x128xf32>
    %267 = arith.addf %263, %266 : vector<2x128xf32>
    %268 = vector.extract_strided_slice %267 {offsets = [0, 0], sizes = [2, 32], strides = [1, 1]} : vector<2x128xf32> to vector<2x32xf32>
    %269 = vector.extract_strided_slice %267 {offsets = [0, 32], sizes = [2, 32], strides = [1, 1]} : vector<2x128xf32> to vector<2x32xf32>
    %270 = vector.extract_strided_slice %267 {offsets = [0, 64], sizes = [2, 32], strides = [1, 1]} : vector<2x128xf32> to vector<2x32xf32>
    %271 = vector.extract_strided_slice %267 {offsets = [0, 96], sizes = [2, 32], strides = [1, 1]} : vector<2x128xf32> to vector<2x32xf32>
    %272 = arith.negf %269 : vector<2x32xf32>
    %273 = math.exp %272 : vector<2x32xf32>
    %cst_140 = arith.constant 1.000000e+00 : f32
    %274 = vector.broadcast %cst_140 : f32 to vector<2x32xf32>
    %275 = arith.addf %274, %273 : vector<2x32xf32>
    %276 = arith.divf %274, %275 : vector<2x32xf32>
    %c0_141 = arith.constant 0 : index
    %c0_142 = arith.constant 0 : index
    %277 = vector.load %arg8[%c0_141, %c0_142] : memref<2x32xf32, #tpu.memory_space<vmem>>, vector<2x32xf32>
    %278 = arith.mulf %276, %277 : vector<2x32xf32>
    %279 = arith.negf %268 : vector<2x32xf32>
    %280 = math.exp %279 : vector<2x32xf32>
    %cst_143 = arith.constant 1.000000e+00 : f32
    %281 = vector.broadcast %cst_143 : f32 to vector<2x32xf32>
    %282 = arith.addf %281, %280 : vector<2x32xf32>
    %283 = arith.divf %281, %282 : vector<2x32xf32>
    %284 = math.tanh %270 : vector<2x32xf32>
    %285 = arith.mulf %283, %284 : vector<2x32xf32>
    %286 = arith.addf %278, %285 : vector<2x32xf32>
    %287 = arith.negf %271 : vector<2x32xf32>
    %288 = math.exp %287 : vector<2x32xf32>
    %cst_144 = arith.constant 1.000000e+00 : f32
    %289 = vector.broadcast %cst_144 : f32 to vector<2x32xf32>
    %290 = arith.addf %289, %288 : vector<2x32xf32>
    %291 = arith.divf %289, %290 : vector<2x32xf32>
    %292 = math.tanh %286 : vector<2x32xf32>
    %293 = arith.mulf %291, %292 : vector<2x32xf32>
    %c0_145 = arith.constant 0 : index
    %c0_146 = arith.constant 0 : index
    %294 = vector.load %arg7[%c0_145, %c0_146] : memref<2x32xf32, #tpu.memory_space<vmem>>, vector<2x32xf32>
    tpu.vector_store %arg7[%c0_145, %c0_146], %293 {strides = array<i32>} : memref<2x32xf32, #tpu.memory_space<vmem>>, vector<2x32xf32>,
    %c0_147 = arith.constant 0 : index
    %c0_148 = arith.constant 0 : index
    %295 = vector.load %arg8[%c0_147, %c0_148] : memref<2x32xf32, #tpu.memory_space<vmem>>, vector<2x32xf32>
    tpu.vector_store %arg8[%c0_147, %c0_148], %286 {strides = array<i32>} : memref<2x32xf32, #tpu.memory_space<vmem>>, vector<2x32xf32>,
    %c7_149 = arith.constant 7 : index
    %c0_150 = arith.constant 0 : index
    %c0_151 = arith.constant 0 : index
    %296 = vector.load %arg5[%c7_149, %c0_150, %c0_151] : memref<8x2x32xf32, #tpu.memory_space<vmem>>, vector<1x2x32xf32>
    %297 = vector.shape_cast %296 : vector<1x2x32xf32> to vector<2x32xf32>
    %298 = vector.shape_cast %293 : vector<2x32xf32> to vector<1x2x32xf32>
    tpu.vector_store %arg5[%c7_149, %c0_150, %c0_151], %298 {strides = array<i32>} : memref<8x2x32xf32, #tpu.memory_space<vmem>>, vector<1x2x32xf32>,
    %c0_152 = arith.constant 0 : index
    %c0_153 = arith.constant 0 : index
    %299 = vector.load %arg8[%c0_152, %c0_153] : memref<2x32xf32, #tpu.memory_space<vmem>>, vector<2x32xf32>
    %c0_154 = arith.constant 0 : index
    %c0_155 = arith.constant 0 : index
    %300 = vector.load %arg6[%c0_154, %c0_155] : memref<2x32xf32, #tpu.memory_space<vmem>>, vector<2x32xf32>
    tpu.vector_store %arg6[%c0_154, %c0_155], %299 {strides = array<i32>} : memref<2x32xf32, #tpu.memory_space<vmem>>, vector<2x32xf32>,
    return
  }
  func.func @transform_0(%arg0: i32) -> (i32, i32, i32) {
    %c0_i32 = arith.constant 0 : i32
    %c0_i32_0 = arith.constant 0 : i32
    %c0_i32_1 = arith.constant 0 : i32
    return %arg0, %c0_i32, %c0_i32_0 : i32, i32, i32
  }
  func.func @transform_1(%arg0: i32) -> (i32, i32) {
    %c0_i32 = arith.constant 0 : i32
    %c0_i32_0 = arith.constant 0 : i32
    %c0_i32_1 = arith.constant 0 : i32
    return %c0_i32, %c0_i32_0 : i32, i32
  }
  func.func @transform_2(%arg0: i32) -> (i32, i32) {
    %c0_i32 = arith.constant 0 : i32
    %c0_i32_0 = arith.constant 0 : i32
    %c0_i32_1 = arith.constant 0 : i32
    return %c0_i32, %c0_i32_0 : i32, i32
  }
  func.func @transform_3(%arg0: i32) -> (i32, i32) {
    %c0_i32 = arith.constant 0 : i32
    %c0_i32_0 = arith.constant 0 : i32
    %c0_i32_1 = arith.constant 0 : i32
    return %c0_i32, %c0_i32_0 : i32, i32
  }
  func.func @transform_4(%arg0: i32) -> (i32, i32, i32) {
    %c0_i32 = arith.constant 0 : i32
    %c0_i32_0 = arith.constant 0 : i32
    %c0_i32_1 = arith.constant 0 : i32
    return %arg0, %c0_i32, %c0_i32_0 : i32, i32, i32
  }
  func.func @transform_5(%arg0: i32) -> (i32, i32) {
    %c0_i32 = arith.constant 0 : i32
    %c0_i32_0 = arith.constant 0 : i32
    %c0_i32_1 = arith.constant 0 : i32
    return %c0_i32, %c0_i32_0 : i32, i32
  }
}

</mosaic_0001>

<llo_original>
// kernel: sqapci_lstm_forward.2
$region0: #{sqapci_lstm_forward.2}
  #allocation0 [shape = 'u32[]', space=smem, size = 0x4, offset = 0x4, fixed_abs, tag = 'smem constant byte address 0x4 - core index']
  #allocation1 [shape = 'u32[144,128]{1,0:T(1,128)}', space=vmem, size = 0x12000, scoped, tag = 'internal scratch']
  #allocation2 [shape = 'f32[2,32]{1,0:T(2,128)}', space=vmem, size = 0x400, scoped, tag = 'scratch operand']
  #allocation3 [shape = 'f32[2,32]{1,0:T(2,128)}', space=vmem, size = 0x400, scoped, tag = 'scratch operand']
  %s0 = inlined_call_operand.vmem [shape: f32[8,2,128], index: 0, kind: input, shape index: {}]
  %s1 = inlined_call_operand.vmem [shape: f32[2,32], index: 1, kind: input, shape index: {}]
  %s2 = inlined_call_operand.vmem [shape: f32[2,32], index: 2, kind: input, shape index: {}]
  %s3 = inlined_call_operand.vmem [shape: f32[32,128], index: 3, kind: input, shape index: {}]
  %s4 = inlined_call_operand.vmem [shape: f32[8,2,32], index: 4, kind: output, shape index: {0}]
  %s5 = inlined_call_operand.vmem [shape: f32[2,32], index: 5, kind: output, shape index: {1}]
  %6 = xla_tuple %s4, %s5
  %s7 = sld [smem:[#allocation0]]
  $region38: #{sqapci_lstm_forward.2} parent=0
    _
  %s9 = ssub.s32 1, %s7
  %s10 = scalar_select 0, %s9, %s7
  // Predicated region
  $region2: #{sqapci_lstm_forward.2} parent=0 // pred_check
    _
  $region3: #{sqapci_lstm_forward.2} parent=0 // pred_check_branch
    %12 = sbr.rel (0) target = $region5
  $region4: #{sqapci_lstm_forward.2} parent=0 // pred_region
    _
  $region5: #{sqapci_lstm_forward.2} parent=0 // pred_fallthru
    _
  // Predicated region
  $region6: #{sqapci_lstm_forward.2} parent=0 // pred_check
    _
  $region7: #{sqapci_lstm_forward.2} parent=0 // pred_check_branch
    %14 = sbr.rel (0) target = $region9
  $region8: #{sqapci_lstm_forward.2} parent=0 // pred_region
    _
  $region9: #{sqapci_lstm_forward.2} parent=0 // pred_fallthru
    _
  // Predicated region
  $region10: #{sqapci_lstm_forward.2} parent=0 // pred_check
    _
  $region11: #{sqapci_lstm_forward.2} parent=0 // pred_check_branch
    %16 = sbr.rel (0) target = $region13
  $region12: #{sqapci_lstm_forward.2} parent=0 // pred_region
    _
  $region13: #{sqapci_lstm_forward.2} parent=0 // pred_fallthru
    _
  // Predicated region
  $region14: #{sqapci_lstm_forward.2} parent=0 // pred_check
    _
  $region15: #{sqapci_lstm_forward.2} parent=0 // pred_check_branch
    %18 = sbr.rel (0) target = $region17
  $region16: #{sqapci_lstm_forward.2} parent=0 // pred_region
    _
  $region17: #{sqapci_lstm_forward.2} parent=0 // pred_fallthru
    _
  %p19 = scmp.eq.s32.totalorder 0, 0
  // Predicated region
  $region18: #{sqapci_lstm_forward.2} parent=0 // pred_check
    %p20 = pneg %p19
  $region19: #{sqapci_lstm_forward.2} parent=0 // pred_check_branch
    %22 = sbr.rel (%p20) target = $region21
  $region20: #{sqapci_lstm_forward.2} parent=0 // pred_region
    %v23 = vld [vmem:[%s1] sm:$0x3]
    %vm24 = vcmask 254976
    %25 = vst.msk [vmem:[#allocation2] sm:$0x3] %vm24, %v23
    %v26 = vld [vmem:[%s2] sm:$0x3]
    %27 = vst.msk [vmem:[#allocation3] sm:$0x3] %vm24, %v26
  $region21: #{sqapci_lstm_forward.2} parent=0 // pred_fallthru
    _
  %v28 = vld [vmem:[%s0] sm:$0x3]
  %v29 = vld [vmem:[#allocation2] sm:$0x3]
  %v30 = vld [vmem:[%s3] sm:$0xff]
  %v31 = vld [vmem:[%s3 + $0x8] sm:$0xff]
  %v32 = vld [vmem:[%s3 + $0x10] sm:$0xff]
  %v33 = vld [vmem:[%s3 + $0x18] sm:$0xff]
  %vm34 = vcmask 261120
  %v36 = vsel %vm34, %v29, 0
  %38 = vmatprep.subr.mxu0 0.0
  %39 = vmatpush1.msra.mxu0 0.0
  %40 = vmatprep.subr.mxu0 0.0
  %41 = vmatpush1.msra.mxu0 0.0
  %42 = vmatprep.subr.mxu0 0.0
  %43 = vmatpush1.msra.mxu0 0.0
  %44 = vmatprep.subr.mxu0 0.0
  %45 = vmatpush1.msra.mxu0 0.0
  %46 = vmatprep.subr.mxu0 0.0
  %47 = vmatpush1.msra.mxu0 0.0
  %48 = vmatprep.subr.mxu0 0.0
  %49 = vmatpush1.msra.mxu0 0.0
  %50 = vmatprep.subr.mxu0 0.0
  %51 = vmatpush1.msra.mxu0 0.0
  %52 = vmatprep.subr.mxu0 0.0
  %53 = vmatpush1.msra.mxu0 0.0
  %54 = vmatprep.subr.mxu0 0.0
  %55 = vmatpush1.msra.mxu0 0.0
  %56 = vmatprep.subr.mxu0 0.0
  %57 = vmatpush1.msra.mxu0 0.0
  %58 = vmatprep.subr.mxu0 0.0
  %59 = vmatpush1.msra.mxu0 0.0
  %60 = vmatprep.subr.mxu0 0.0
  %61 = vmatpush1.msra.mxu0 0.0
  %62 = vmatprep.subr.mxu0 0.0
  %63 = vmatpush1.msra.mxu0 %v33
  %64 = vmatprep.subr.mxu0 0.0
  %65 = vmatpush1.msra.mxu0 %v32
  %66 = vmatprep.subr.mxu0 0.0
  %67 = vmatpush1.msra.mxu0 %v31
  %68 = vmatprep.subr.mxu0 0.0
  %69 = vmatpush1.msra.mxu0 %v30
  %70 = vmatprep.subr.mxu0 0.0
  %71 = vmatpush2.msra.mxu0 0.0
  %72 = vmatprep.subr.mxu0 0.0
  %73 = vmatpush2.msra.mxu0 0.0
  %74 = vmatprep.subr.mxu0 0.0
  %75 = vmatpush2.msra.mxu0 0.0
  %76 = vmatprep.subr.mxu0 0.0
  %77 = vmatpush2.msra.mxu0 0.0
  %78 = vmatprep.subr.mxu0 0.0
  %79 = vmatpush2.msra.mxu0 0.0
  %80 = vmatprep.subr.mxu0 0.0
  %81 = vmatpush2.msra.mxu0 0.0
  %82 = vmatprep.subr.mxu0 0.0
  %83 = vmatpush2.msra.mxu0 0.0
  %84 = vmatprep.subr.mxu0 0.0
  %85 = vmatpush2.msra.mxu0 0.0
  %86 = vmatprep.subr.mxu0 0.0
  %87 = vmatpush2.msra.mxu0 0.0
  %88 = vmatprep.subr.mxu0 0.0
  %89 = vmatpush2.msra.mxu0 0.0
  %90 = vmatprep.subr.mxu0 0.0
  %91 = vmatpush2.msra.mxu0 0.0
  %92 = vmatprep.subr.mxu0 0.0
  %93 = vmatpush2.msra.mxu0 0.0
  %94 = vmatprep.subr.mxu0 0.0
  %95 = vmatpush2.msra.mxu0 0.0
  %96 = vmatprep.subr.mxu0 0.0
  %97 = vmatpush2.msra.mxu0 0.0
  %98 = vmatprep.subr.mxu0 0.0
  %99 = vmatpush2.msra.mxu0 0.0
  %100 = vmatprep.subr.mxu0 0.0
  %101 = vmatpush2.msra.mxu0 0.0
  %102 = vmatprep.mubr.f32.mxu0 0.0
  %103 = vmatmul.mubr.f32.gmra.mxu0 %v36
  %v104 = vpop.f32.mrf.mxu0
  %v105 = vadd.f32 0.0, %v104
  %v106 = vpop.f32.mrf.mxu0
  %107 = vdwg.mxu0
  %v108 = vadd.f32 %v28, %v105
  %v109 = vxor.u32 %v108, 2147483648
  %v110 = vmul.f32 %v109, 1.442695
  %v111 = vpow.pop %v110
  %v112 = vadd.f32 %v111, 1.0
  %v113 = vrcp.pop %v112
  %v114 = vmul.f32 1.0, %v113
  %v115 = vld [vmem:[#allocation3] sm:$0x3]
  %117 = vrot.lane.b32.xlu0 %v115, 32
  %v118 = vpop.permute.xlu0 %117
  %v120 = vmul.f32 %v114, %v118
  %v121 = vtanh.pop %v108
  %123 = vrot.lane.b32.xlu0 %v121, 64
  %v124 = vpop.permute.xlu0 %123
  %v126 = vmul.f32 %v114, %v124
  %128 = vrot.lane.b32.xlu0 %v126, 32
  %v129 = vpop.permute.xlu0 %128
  %v131 = vadd.f32 %v120, %v129
  %v132 = vtanh.pop %v131
  %134 = vrot.lane.b32.xlu0 %v132, 64
  %v135 = vpop.permute.xlu0 %134
  %v137 = vmul.f32 %v114, %v135
  %139 = vrot.lane.b32.xlu0 %v137, 32
  %v140 = vpop.permute.xlu0 %139
  %vm142 = vcmask 254976
  %143 = vst.msk [vmem:[#allocation2] sm:$0x3] %vm142, %v140
  %145 = vrot.lane.b32.xlu0 %v131, 96
  %v146 = vpop.permute.xlu0 %145
  %148 = vst.msk [vmem:[#allocation3] sm:$0x3] %vm142, %v146
  %149 = vst.msk [vmem:[%s4] sm:$0x3] %vm142, %v140
  %s150 = scalar_lea.vmem %s0, 2
  %v151 = vld [vmem:[%s150] sm:$0x3]
  %v152 = vld [vmem:[#allocation2] sm:$0x3]
  %v153 = vld [vmem:[%s3] sm:$0xff]
  %v154 = vld [vmem:[%s3 + $0x8] sm:$0xff]
  %v155 = vld [vmem:[%s3 + $0x10] sm:$0xff]
  %v156 = vld [vmem:[%s3 + $0x18] sm:$0xff]
  %v158 = vsel %vm34, %v152, 0
  %160 = vmatprep.subr.mxu0 0.0
  %161 = vmatpush1.msra.mxu0 0.0
  %162 = vmatprep.subr.mxu0 0.0
  %163 = vmatpush1.msra.mxu0 0.0
  %164 = vmatprep.subr.mxu0 0.0
  %165 = vmatpush1.msra.mxu0 0.0
  %166 = vmatprep.subr.mxu0 0.0
  %167 = vmatpush1.msra.mxu0 0.0
  %168 = vmatprep.subr.mxu0 0.0
  %169 = vmatpush1.msra.mxu0 0.0
  %170 = vmatprep.subr.mxu0 0.0
  %171 = vmatpush1.msra.mxu0 0.0
  %172 = vmatprep.subr.mxu0 0.0
  %173 = vmatpush1.msra.mxu0 0.0
  %174 = vmatprep.subr.mxu0 0.0
  %175 = vmatpush1.msra.mxu0 0.0
  %176 = vmatprep.subr.mxu0 0.0
  %177 = vmatpush1.msra.mxu0 0.0
  %178 = vmatprep.subr.mxu0 0.0
  %179 = vmatpush1.msra.mxu0 0.0
  %180 = vmatprep.subr.mxu0 0.0
  %181 = vmatpush1.msra.mxu0 0.0
  %182 = vmatprep.subr.mxu0 0.0
  %183 = vmatpush1.msra.mxu0 0.0
  %184 = vmatprep.subr.mxu0 0.0
  %185 = vmatpush1.msra.mxu0 %v156
  %186 = vmatprep.subr.mxu0 0.0
  %187 = vmatpush1.msra.mxu0 %v155
  %188 = vmatprep.subr.mxu0 0.0
  %189 = vmatpush1.msra.mxu0 %v154
  %190 = vmatprep.subr.mxu0 0.0
  %191 = vmatpush1.msra.mxu0 %v153
  %192 = vmatprep.subr.mxu0 0.0
  %193 = vmatpush2.msra.mxu0 0.0
  %194 = vmatprep.subr.mxu0 0.0
  %195 = vmatpush2.msra.mxu0 0.0
  %196 = vmatprep.subr.mxu0 0.0
  %197 = vmatpush2.msra.mxu0 0.0
  %198 = vmatprep.subr.mxu0 0.0
  %199 = vmatpush2.msra.mxu0 0.0
  %200 = vmatprep.subr.mxu0 0.0
  %201 = vmatpush2.msra.mxu0 0.0
  %202 = vmatprep.subr.mxu0 0.0
  %203 = vmatpush2.msra.mxu0 0.0
  %204 = vmatprep.subr.mxu0 0.0
  %205 = vmatpush2.msra.mxu0 0.0
  %206 = vmatprep.subr.mxu0 0.0
  %207 = vmatpush2.msra.mxu0 0.0
  %208 = vmatprep.subr.mxu0 0.0
  %209 = vmatpush2.msra.mxu0 0.0
  %210 = vmatprep.subr.mxu0 0.0
  %211 = vmatpush2.msra.mxu0 0.0
  %212 = vmatprep.subr.mxu0 0.0
  %213 = vmatpush2.msra.mxu0 0.0
  %214 = vmatprep.subr.mxu0 0.0
  %215 = vmatpush2.msra.mxu0 0.0
  %216 = vmatprep.subr.mxu0 0.0
  %217 = vmatpush2.msra.mxu0 0.0
  %218 = vmatprep.subr.mxu0 0.0
  %219 = vmatpush2.msra.mxu0 0.0
  %220 = vmatprep.subr.mxu0 0.0
  %221 = vmatpush2.msra.mxu0 0.0
  %222 = vmatprep.subr.mxu0 0.0
  %223 = vmatpush2.msra.mxu0 0.0
  %224 = vmatprep.mubr.f32.mxu0 0.0
  %225 = vmatmul.mubr.f32.gmra.mxu0 %v158
  %v226 = vpop.f32.mrf.mxu0
  %v227 = vadd.f32 0.0, %v226
  %v228 = vpop.f32.mrf.mxu0
  %229 = vdwg.mxu0
  %v230 = vadd.f32 %v151, %v227
  %v231 = vxor.u32 %v230, 2147483648
  %v232 = vmul.f32 %v231, 1.442695
  %v233 = vpow.pop %v232
  %v234 = vadd.f32 %v233, 1.0
  %v235 = vrcp.pop %v234
  %v236 = vmul.f32 1.0, %v235
  %v237 = vld [vmem:[#allocation3] sm:$0x3]
  %239 = vrot.lane.b32.xlu0 %v237, 32
  %v240 = vpop.permute.xlu0 %239
  %v242 = vmul.f32 %v236, %v240
  %v243 = vtanh.pop %v230
  %245 = vrot.lane.b32.xlu0 %v243, 64
  %v246 = vpop.permute.xlu0 %245
  %v248 = vmul.f32 %v236, %v246
  %250 = vrot.lane.b32.xlu0 %v248, 32
  %v251 = vpop.permute.xlu0 %250
  %v253 = vadd.f32 %v242, %v251
  %v254 = vtanh.pop %v253
  %256 = vrot.lane.b32.xlu0 %v254, 64
  %v257 = vpop.permute.xlu0 %256
  %v259 = vmul.f32 %v236, %v257
  %261 = vrot.lane.b32.xlu0 %v259, 32
  %v262 = vpop.permute.xlu0 %261
  %264 = vst.msk [vmem:[#allocation2] sm:$0x3] %vm142, %v262
  %266 = vrot.lane.b32.xlu0 %v253, 96
  %v267 = vpop.permute.xlu0 %266
  %269 = vst.msk [vmem:[#allocation3] sm:$0x3] %vm142, %v267
  %s270 = scalar_lea.vmem %s4, 2
  %271 = vst.msk [vmem:[%s270] sm:$0x3] %vm142, %v262
  %s272 = scalar_lea.vmem %s0, 4
  %v273 = vld [vmem:[%s272] sm:$0x3]
  %v274 = vld [vmem:[#allocation2] sm:$0x3]
  %v275 = vld [vmem:[%s3] sm:$0xff]
  %v276 = vld [vmem:[%s3 + $0x8] sm:$0xff]
  %v277 = vld [vmem:[%s3 + $0x10] sm:$0xff]
  %v278 = vld [vmem:[%s3 + $0x18] sm:$0xff]
  %v280 = vsel %vm34, %v274, 0
  %282 = vmatprep.subr.mxu0 0.0
  %283 = vmatpush1.msra.mxu0 0.0
  %284 = vmatprep.subr.mxu0 0.0
  %285 = vmatpush1.msra.mxu0 0.0
  %286 = vmatprep.subr.mxu0 0.0
  %287 = vmatpush1.msra.mxu0 0.0
  %288 = vmatprep.subr.mxu0 0.0
  %289 = vmatpush1.msra.mxu0 0.0
  %290 = vmatprep.subr.mxu0 0.0
  %291 = vmatpush1.msra.mxu0 0.0
  %292 = vmatprep.subr.mxu0 0.0
  %293 = vmatpush1.msra.mxu0 0.0
  %294 = vmatprep.subr.mxu0 0.0
  %295 = vmatpush1.msra.mxu0 0.0
  %296 = vmatprep.subr.mxu0 0.0
  %297 = vmatpush1.msra.mxu0 0.0
  %298 = vmatprep.subr.mxu0 0.0
  %299 = vmatpush1.msra.mxu0 0.0
  %300 = vmatprep.subr.mxu0 0.0
  %301 = vmatpush1.msra.mxu0 0.0
  %302 = vmatprep.subr.mxu0 0.0
  %303 = vmatpush1.msra.mxu0 0.0
  %304 = vmatprep.subr.mxu0 0.0
  %305 = vmatpush1.msra.mxu0 0.0
  %306 = vmatprep.subr.mxu0 0.0
  %307 = vmatpush1.msra.mxu0 %v278
  %308 = vmatprep.subr.mxu0 0.0
  %309 = vmatpush1.msra.mxu0 %v277
  %310 = vmatprep.subr.mxu0 0.0
  %311 = vmatpush1.msra.mxu0 %v276
  %312 = vmatprep.subr.mxu0 0.0
  %313 = vmatpush1.msra.mxu0 %v275
  %314 = vmatprep.subr.mxu0 0.0
  %315 = vmatpush2.msra.mxu0 0.0
  %316 = vmatprep.subr.mxu0 0.0
  %317 = vmatpush2.msra.mxu0 0.0
  %318 = vmatprep.subr.mxu0 0.0
  %319 = vmatpush2.msra.mxu0 0.0
  %320 = vmatprep.subr.mxu0 0.0
  %321 = vmatpush2.msra.mxu0 0.0
  %322 = vmatprep.subr.mxu0 0.0
  %323 = vmatpush2.msra.mxu0 0.0
  %324 = vmatprep.subr.mxu0 0.0
  %325 = vmatpush2.msra.mxu0 0.0
  %326 = vmatprep.subr.mxu0 0.0
  %327 = vmatpush2.msra.mxu0 0.0
  %328 = vmatprep.subr.mxu0 0.0
  %329 = vmatpush2.msra.mxu0 0.0
  %330 = vmatprep.subr.mxu0 0.0
  %331 = vmatpush2.msra.mxu0 0.0
  %332 = vmatprep.subr.mxu0 0.0
  %333 = vmatpush2.msra.mxu0 0.0
  %334 = vmatprep.subr.mxu0 0.0
  %335 = vmatpush2.msra.mxu0 0.0
  %336 = vmatprep.subr.mxu0 0.0
  %337 = vmatpush2.msra.mxu0 0.0
  %338 = vmatprep.subr.mxu0 0.0
  %339 = vmatpush2.msra.mxu0 0.0
  %340 = vmatprep.subr.mxu0 0.0
  %341 = vmatpush2.msra.mxu0 0.0
  %342 = vmatprep.subr.mxu0 0.0
  %343 = vmatpush2.msra.mxu0 0.0
  %344 = vmatprep.subr.mxu0 0.0
  %345 = vmatpush2.msra.mxu0 0.0
  %346 = vmatprep.mubr.f32.mxu0 0.0
  %347 = vmatmul.mubr.f32.gmra.mxu0 %v280
  %v348 = vpop.f32.mrf.mxu0
  %v349 = vadd.f32 0.0, %v348
  %v350 = vpop.f32.mrf.mxu0
  %351 = vdwg.mxu0
  %v352 = vadd.f32 %v273, %v349
  %v353 = vxor.u32 %v352, 2147483648
  %v354 = vmul.f32 %v353, 1.442695
  %v355 = vpow.pop %v354
  %v356 = vadd.f32 %v355, 1.0
  %v357 = vrcp.pop %v356
  %v358 = vmul.f32 1.0, %v357
  %v359 = vld [vmem:[#allocation3] sm:$0x3]
  %361 = vrot.lane.b32.xlu0 %v359, 32
  %v362 = vpop.permute.xlu0 %361
  %v364 = vmul.f32 %v358, %v362
  %v365 = vtanh.pop %v352
  %367 = vrot.lane.b32.xlu0 %v365, 64
  %v368 = vpop.permute.xlu0 %367
  %v370 = vmul.f32 %v358, %v368
  %372 = vrot.lane.b32.xlu0 %v370, 32
  %v373 = vpop.permute.xlu0 %372
  %v375 = vadd.f32 %v364, %v373
  %v376 = vtanh.pop %v375
  %378 = vrot.lane.b32.xlu0 %v376, 64
  %v379 = vpop.permute.xlu0 %378
  %v381 = vmul.f32 %v358, %v379
  %383 = vrot.lane.b32.xlu0 %v381, 32
  %v384 = vpop.permute.xlu0 %383
  %386 = vst.msk [vmem:[#allocation2] sm:$0x3] %vm142, %v384
  %388 = vrot.lane.b32.xlu0 %v375, 96
  %v389 = vpop.permute.xlu0 %388
  %391 = vst.msk [vmem:[#allocation3] sm:$0x3] %vm142, %v389
  %s392 = scalar_lea.vmem %s4, 4
  %393 = vst.msk [vmem:[%s392] sm:$0x3] %vm142, %v384
  %s394 = scalar_lea.vmem %s0, 6
  %v395 = vld [vmem:[%s394] sm:$0x3]
  %v396 = vld [vmem:[#allocation2] sm:$0x3]
  %v397 = vld [vmem:[%s3] sm:$0xff]
  %v398 = vld [vmem:[%s3 + $0x8] sm:$0xff]
  %v399 = vld [vmem:[%s3 + $0x10] sm:$0xff]
  %v400 = vld [vmem:[%s3 + $0x18] sm:$0xff]
  %v402 = vsel %vm34, %v396, 0
  %404 = vmatprep.subr.mxu0 0.0
  %405 = vmatpush1.msra.mxu0 0.0
  %406 = vmatprep.subr.mxu0 0.0
  %407 = vmatpush1.msra.mxu0 0.0
  %408 = vmatprep.subr.mxu0 0.0
  %409 = vmatpush1.msra.mxu0 0.0
  %410 = vmatprep.subr.mxu0 0.0
  %411 = vmatpush1.msra.mxu0 0.0
  %412 = vmatprep.subr.mxu0 0.0
  %413 = vmatpush1.msra.mxu0 0.0
  %414 = vmatprep.subr.mxu0 0.0
  %415 = vmatpush1.msra.mxu0 0.0
  %416 = vmatprep.subr.mxu0 0.0
  %417 = vmatpush1.msra.mxu0 0.0
  %418 = vmatprep.subr.mxu0 0.0
  %419 = vmatpush1.msra.mxu0 0.0
  %420 = vmatprep.subr.mxu0 0.0
  %421 = vmatpush1.msra.mxu0 0.0
  %422 = vmatprep.subr.mxu0 0.0
  %423 = vmatpush1.msra.mxu0 0.0
  %424 = vmatprep.subr.mxu0 0.0
  %425 = vmatpush1.msra.mxu0 0.0
  %426 = vmatprep.subr.mxu0 0.0
  %427 = vmatpush1.msra.mxu0 0.0
  %428 = vmatprep.subr.mxu0 0.0
  %429 = vmatpush1.msra.mxu0 %v400
  %430 = vmatprep.subr.mxu0 0.0
  %431 = vmatpush1.msra.mxu0 %v399
  %432 = vmatprep.subr.mxu0 0.0
  %433 = vmatpush1.msra.mxu0 %v398
  %434 = vmatprep.subr.mxu0 0.0
  %435 = vmatpush1.msra.mxu0 %v397
  %436 = vmatprep.subr.mxu0 0.0
  %437 = vmatpush2.msra.mxu0 0.0
  %438 = vmatprep.subr.mxu0 0.0
  %439 = vmatpush2.msra.mxu0 0.0
  %440 = vmatprep.subr.mxu0 0.0
  %441 = vmatpush2.msra.mxu0 0.0
  %442 = vmatprep.subr.mxu0 0.0
  %443 = vmatpush2.msra.mxu0 0.0
  %444 = vmatprep.subr.mxu0 0.0
  %445 = vmatpush2.msra.mxu0 0.0
  %446 = vmatprep.subr.mxu0 0.0
  %447 = vmatpush2.msra.mxu0 0.0
  %448 = vmatprep.subr.mxu0 0.0
  %449 = vmatpush2.msra.mxu0 0.0
  %450 = vmatprep.subr.mxu0 0.0
  %451 = vmatpush2.msra.mxu0 0.0
  %452 = vmatprep.subr.mxu0 0.0
  %453 = vmatpush2.msra.mxu0 0.0
  %454 = vmatprep.subr.mxu0 0.0
  %455 = vmatpush2.msra.mxu0 0.0
  %456 = vmatprep.subr.mxu0 0.0
  %457 = vmatpush2.msra.mxu0 0.0
  %458 = vmatprep.subr.mxu0 0.0
  %459 = vmatpush2.msra.mxu0 0.0
  %460 = vmatprep.subr.mxu0 0.0
  %461 = vmatpush2.msra.mxu0 0.0
  %462 = vmatprep.subr.mxu0 0.0
  %463 = vmatpush2.msra.mxu0 0.0
  %464 = vmatprep.subr.mxu0 0.0
  %465 = vmatpush2.msra.mxu0 0.0
  %466 = vmatprep.subr.mxu0 0.0
  %467 = vmatpush2.msra.mxu0 0.0
  %468 = vmatprep.mubr.f32.mxu0 0.0
  %469 = vmatmul.mubr.f32.gmra.mxu0 %v402
  %v470 = vpop.f32.mrf.mxu0
  %v471 = vadd.f32 0.0, %v470
  %v472 = vpop.f32.mrf.mxu0
  %473 = vdwg.mxu0
  %v474 = vadd.f32 %v395, %v471
  %v475 = vxor.u32 %v474, 2147483648
  %v476 = vmul.f32 %v475, 1.442695
  %v477 = vpow.pop %v476
  %v478 = vadd.f32 %v477, 1.0
  %v479 = vrcp.pop %v478
  %v480 = vmul.f32 1.0, %v479
  %v481 = vld [vmem:[#allocation3] sm:$0x3]
  %483 = vrot.lane.b32.xlu0 %v481, 32
  %v484 = vpop.permute.xlu0 %483
  %v486 = vmul.f32 %v480, %v484
  %v487 = vtanh.pop %v474
  %489 = vrot.lane.b32.xlu0 %v487, 64
  %v490 = vpop.permute.xlu0 %489
  %v492 = vmul.f32 %v480, %v490
  %494 = vrot.lane.b32.xlu0 %v492, 32
  %v495 = vpop.permute.xlu0 %494
  %v497 = vadd.f32 %v486, %v495
  %v498 = vtanh.pop %v497
  %500 = vrot.lane.b32.xlu0 %v498, 64
  %v501 = vpop.permute.xlu0 %500
  %v503 = vmul.f32 %v480, %v501
  %505 = vrot.lane.b32.xlu0 %v503, 32
  %v506 = vpop.permute.xlu0 %505
  %508 = vst.msk [vmem:[#allocation2] sm:$0x3] %vm142, %v506
  %510 = vrot.lane.b32.xlu0 %v497, 96
  %v511 = vpop.permute.xlu0 %510
  %513 = vst.msk [vmem:[#allocation3] sm:$0x3] %vm142, %v511
  %s514 = scalar_lea.vmem %s4, 6
  %515 = vst.msk [vmem:[%s514] sm:$0x3] %vm142, %v506
  %s516 = scalar_lea.vmem %s0, 8
  %v517 = vld [vmem:[%s516] sm:$0x3]
  %v518 = vld [vmem:[#allocation2] sm:$0x3]
  %v519 = vld [vmem:[%s3] sm:$0xff]
  %v520 = vld [vmem:[%s3 + $0x8] sm:$0xff]
  %v521 = vld [vmem:[%s3 + $0x10] sm:$0xff]
  %v522 = vld [vmem:[%s3 + $0x18] sm:$0xff]
  %v524 = vsel %vm34, %v518, 0
  %526 = vmatprep.subr.mxu0 0.0
  %527 = vmatpush1.msra.mxu0 0.0
  %528 = vmatprep.subr.mxu0 0.0
  %529 = vmatpush1.msra.mxu0 0.0
  %530 = vmatprep.subr.mxu0 0.0
  %531 = vmatpush1.msra.mxu0 0.0
  %532 = vmatprep.subr.mxu0 0.0
  %533 = vmatpush1.msra.mxu0 0.0
  %534 = vmatprep.subr.mxu0 0.0
  %535 = vmatpush1.msra.mxu0 0.0
  %536 = vmatprep.subr.mxu0 0.0
  %537 = vmatpush1.msra.mxu0 0.0
  %538 = vmatprep.subr.mxu0 0.0
  %539 = vmatpush1.msra.mxu0 0.0
  %540 = vmatprep.subr.mxu0 0.0
  %541 = vmatpush1.msra.mxu0 0.0
  %542 = vmatprep.subr.mxu0 0.0
  %543 = vmatpush1.msra.mxu0 0.0
  %544 = vmatprep.subr.mxu0 0.0
  %545 = vmatpush1.msra.mxu0 0.0
  %546 = vmatprep.subr.mxu0 0.0
  %547 = vmatpush1.msra.mxu0 0.0
  %548 = vmatprep.subr.mxu0 0.0
  %549 = vmatpush1.msra.mxu0 0.0
  %550 = vmatprep.subr.mxu0 0.0
  %551 = vmatpush1.msra.mxu0 %v522
  %552 = vmatprep.subr.mxu0 0.0
  %553 = vmatpush1.msra.mxu0 %v521
  %554 = vmatprep.subr.mxu0 0.0
  %555 = vmatpush1.msra.mxu0 %v520
  %556 = vmatprep.subr.mxu0 0.0
  %557 = vmatpush1.msra.mxu0 %v519
  %558 = vmatprep.subr.mxu0 0.0
  %559 = vmatpush2.msra.mxu0 0.0
  %560 = vmatprep.subr.mxu0 0.0
  %561 = vmatpush2.msra.mxu0 0.0
  %562 = vmatprep.subr.mxu0 0.0
  %563 = vmatpush2.msra.mxu0 0.0
  %564 = vmatprep.subr.mxu0 0.0
  %565 = vmatpush2.msra.mxu0 0.0
  %566 = vmatprep.subr.mxu0 0.0
  %567 = vmatpush2.msra.mxu0 0.0
  %568 = vmatprep.subr.mxu0 0.0
  %569 = vmatpush2.msra.mxu0 0.0
  %570 = vmatprep.subr.mxu0 0.0
  %571 = vmatpush2.msra.mxu0 0.0
  %572 = vmatprep.subr.mxu0 0.0
  %573 = vmatpush2.msra.mxu0 0.0
  %574 = vmatprep.subr.mxu0 0.0
  %575 = vmatpush2.msra.mxu0 0.0
  %576 = vmatprep.subr.mxu0 0.0
  %577 = vmatpush2.msra.mxu0 0.0
  %578 = vmatprep.subr.mxu0 0.0
  %579 = vmatpush2.msra.mxu0 0.0
  %580 = vmatprep.subr.mxu0 0.0
  %581 = vmatpush2.msra.mxu0 0.0
  %582 = vmatprep.subr.mxu0 0.0
  %583 = vmatpush2.msra.mxu0 0.0
  %584 = vmatprep.subr.mxu0 0.0
  %585 = vmatpush2.msra.mxu0 0.0
  %586 = vmatprep.subr.mxu0 0.0
  %587 = vmatpush2.msra.mxu0 0.0
  %588 = vmatprep.subr.mxu0 0.0
  %589 = vmatpush2.msra.mxu0 0.0
  %590 = vmatprep.mubr.f32.mxu0 0.0
  %591 = vmatmul.mubr.f32.gmra.mxu0 %v524
  %v592 = vpop.f32.mrf.mxu0
  %v593 = vadd.f32 0.0, %v592
  %v594 = vpop.f32.mrf.mxu0
  %595 = vdwg.mxu0
  %v596 = vadd.f32 %v517, %v593
  %v597 = vxor.u32 %v596, 2147483648
  %v598 = vmul.f32 %v597, 1.442695
  %v599 = vpow.pop %v598
  %v600 = vadd.f32 %v599, 1.0
  %v601 = vrcp.pop %v600
  %v602 = vmul.f32 1.0, %v601
  %v603 = vld [vmem:[#allocation3] sm:$0x3]
  %605 = vrot.lane.b32.xlu0 %v603, 32
  %v606 = vpop.permute.xlu0 %605
  %v608 = vmul.f32 %v602, %v606
  %v609 = vtanh.pop %v596
  %611 = vrot.lane.b32.xlu0 %v609, 64
  %v612 = vpop.permute.xlu0 %611
  %v614 = vmul.f32 %v602, %v612
  %616 = vrot.lane.b32.xlu0 %v614, 32
  %v617 = vpop.permute.xlu0 %616
  %v619 = vadd.f32 %v608, %v617
  %v620 = vtanh.pop %v619
  %622 = vrot.lane.b32.xlu0 %v620, 64
  %v623 = vpop.permute.xlu0 %622
  %v625 = vmul.f32 %v602, %v623
  %627 = vrot.lane.b32.xlu0 %v625, 32
  %v628 = vpop.permute.xlu0 %627
  %630 = vst.msk [vmem:[#allocation2] sm:$0x3] %vm142, %v628
  %632 = vrot.lane.b32.xlu0 %v619, 96
  %v633 = vpop.permute.xlu0 %632
  %635 = vst.msk [vmem:[#allocation3] sm:$0x3] %vm142, %v633
  %s636 = scalar_lea.vmem %s4, 8
  %637 = vst.msk [vmem:[%s636] sm:$0x3] %vm142, %v628
  %s638 = scalar_lea.vmem %s0, 10
  %v639 = vld [vmem:[%s638] sm:$0x3]
  %v640 = vld [vmem:[#allocation2] sm:$0x3]
  %v641 = vld [vmem:[%s3] sm:$0xff]
  %v642 = vld [vmem:[%s3 + $0x8] sm:$0xff]
  %v643 = vld [vmem:[%s3 + $0x10] sm:$0xff]
  %v644 = vld [vmem:[%s3 + $0x18] sm:$0xff]
  %v646 = vsel %vm34, %v640, 0
  %648 = vmatprep.subr.mxu0 0.0
  %649 = vmatpush1.msra.mxu0 0.0
  %650 = vmatprep.subr.mxu0 0.0
  %651 = vmatpush1.msra.mxu0 0.0
  %652 = vmatprep.subr.mxu0 0.0
  %653 = vmatpush1.msra.mxu0 0.0
  %654 = vmatprep.subr.mxu0 0.0
  %655 = vmatpush1.msra.mxu0 0.0
  %656 = vmatprep.subr.mxu0 0.0
  %657 = vmatpush1.msra.mxu0 0.0
  %658 = vmatprep.subr.mxu0 0.0
  %659 = vmatpush1.msra.mxu0 0.0
  %660 = vmatprep.subr.mxu0 0.0
  %661 = vmatpush1.msra.mxu0 0.0
  %662 = vmatprep.subr.mxu0 0.0
  %663 = vmatpush1.msra.mxu0 0.0
  %664 = vmatprep.subr.mxu0 0.0
  %665 = vmatpush1.msra.mxu0 0.0
  %666 = vmatprep.subr.mxu0 0.0
  %667 = vmatpush1.msra.mxu0 0.0
  %668 = vmatprep.subr.mxu0 0.0
  %669 = vmatpush1.msra.mxu0 0.0
  %670 = vmatprep.subr.mxu0 0.0
  %671 = vmatpush1.msra.mxu0 0.0
  %672 = vmatprep.subr.mxu0 0.0
  %673 = vmatpush1.msra.mxu0 %v644
  %674 = vmatprep.subr.mxu0 0.0
  %675 = vmatpush1.msra.mxu0 %v643
  %676 = vmatprep.subr.mxu0 0.0
  %677 = vmatpush1.msra.mxu0 %v642
  %678 = vmatprep.subr.mxu0 0.0
  %679 = vmatpush1.msra.mxu0 %v641
  %680 = vmatprep.subr.mxu0 0.0
  %681 = vmatpush2.msra.mxu0 0.0
  %682 = vmatprep.subr.mxu0 0.0
  %683 = vmatpush2.msra.mxu0 0.0
  %684 = vmatprep.subr.mxu0 0.0
  %685 = vmatpush2.msra.mxu0 0.0
  %686 = vmatprep.subr.mxu0 0.0
  %687 = vmatpush2.msra.mxu0 0.0
  %688 = vmatprep.subr.mxu0 0.0
  %689 = vmatpush2.msra.mxu0 0.0
  %690 = vmatprep.subr.mxu0 0.0
  %691 = vmatpush2.msra.mxu0 0.0
  %692 = vmatprep.subr.mxu0 0.0
  %693 = vmatpush2.msra.mxu0 0.0
  %694 = vmatprep.subr.mxu0 0.0
  %695 = vmatpush2.msra.mxu0 0.0
  %696 = vmatprep.subr.mxu0 0.0
  %697 = vmatpush2.msra.mxu0 0.0
  %698 = vmatprep.subr.mxu0 0.0
  %699 = vmatpush2.msra.mxu0 0.0
  %700 = vmatprep.subr.mxu0 0.0
  %701 = vmatpush2.msra.mxu0 0.0
  %702 = vmatprep.subr.mxu0 0.0
  %703 = vmatpush2.msra.mxu0 0.0
  %704 = vmatprep.subr.mxu0 0.0
  %705 = vmatpush2.msra.mxu0 0.0
  %706 = vmatprep.subr.mxu0 0.0
  %707 = vmatpush2.msra.mxu0 0.0
  %708 = vmatprep.subr.mxu0 0.0
  %709 = vmatpush2.msra.mxu0 0.0
  %710 = vmatprep.subr.mxu0 0.0
  %711 = vmatpush2.msra.mxu0 0.0
  %712 = vmatprep.mubr.f32.mxu0 0.0
  %713 = vmatmul.mubr.f32.gmra.mxu0 %v646
  %v714 = vpop.f32.mrf.mxu0
  %v715 = vadd.f32 0.0, %v714
  %v716 = vpop.f32.mrf.mxu0
  %717 = vdwg.mxu0
  %v718 = vadd.f32 %v639, %v715
  %v719 = vxor.u32 %v718, 2147483648
  %v720 = vmul.f32 %v719, 1.442695
  %v721 = vpow.pop %v720
  %v722 = vadd.f32 %v721, 1.0
  %v723 = vrcp.pop %v722
  %v724 = vmul.f32 1.0, %v723
  %v725 = vld [vmem:[#allocation3] sm:$0x3]
  %727 = vrot.lane.b32.xlu0 %v725, 32
  %v728 = vpop.permute.xlu0 %727
  %v730 = vmul.f32 %v724, %v728
  %v731 = vtanh.pop %v718
  %733 = vrot.lane.b32.xlu0 %v731, 64
  %v734 = vpop.permute.xlu0 %733
  %v736 = vmul.f32 %v724, %v734
  %738 = vrot.lane.b32.xlu0 %v736, 32
  %v739 = vpop.permute.xlu0 %738
  %v741 = vadd.f32 %v730, %v739
  %v742 = vtanh.pop %v741
  %744 = vrot.lane.b32.xlu0 %v742, 64
  %v745 = vpop.permute.xlu0 %744
  %v747 = vmul.f32 %v724, %v745
  %749 = vrot.lane.b32.xlu0 %v747, 32
  %v750 = vpop.permute.xlu0 %749
  %752 = vst.msk [vmem:[#allocation2] sm:$0x3] %vm142, %v750
  %754 = vrot.lane.b32.xlu0 %v741, 96
  %v755 = vpop.permute.xlu0 %754
  %757 = vst.msk [vmem:[#allocation3] sm:$0x3] %vm142, %v755
  %s758 = scalar_lea.vmem %s4, 10
  %759 = vst.msk [vmem:[%s758] sm:$0x3] %vm142, %v750
  %s760 = scalar_lea.vmem %s0, 12
  %v761 = vld [vmem:[%s760] sm:$0x3]
  %v762 = vld [vmem:[#allocation2] sm:$0x3]
  %v763 = vld [vmem:[%s3] sm:$0xff]
  %v764 = vld [vmem:[%s3 + $0x8] sm:$0xff]
  %v765 = vld [vmem:[%s3 + $0x10] sm:$0xff]
  %v766 = vld [vmem:[%s3 + $0x18] sm:$0xff]
  %v768 = vsel %vm34, %v762, 0
  %770 = vmatprep.subr.mxu0 0.0
  %771 = vmatpush1.msra.mxu0 0.0
  %772 = vmatprep.subr.mxu0 0.0
  %773 = vmatpush1.msra.mxu0 0.0
  %774 = vmatprep.subr.mxu0 0.0
  %775 = vmatpush1.msra.mxu0 0.0
  %776 = vmatprep.subr.mxu0 0.0
  %777 = vmatpush1.msra.mxu0 0.0
  %778 = vmatprep.subr.mxu0 0.0
  %779 = vmatpush1.msra.mxu0 0.0
  %780 = vmatprep.subr.mxu0 0.0
  %781 = vmatpush1.msra.mxu0 0.0
  %782 = vmatprep.subr.mxu0 0.0
  %783 = vmatpush1.msra.mxu0 0.0
  %784 = vmatprep.subr.mxu0 0.0
  %785 = vmatpush1.msra.mxu0 0.0
  %786 = vmatprep.subr.mxu0 0.0
  %787 = vmatpush1.msra.mxu0 0.0
  %788 = vmatprep.subr.mxu0 0.0
  %789 = vmatpush1.msra.mxu0 0.0
  %790 = vmatprep.subr.mxu0 0.0
  %791 = vmatpush1.msra.mxu0 0.0
  %792 = vmatprep.subr.mxu0 0.0
  %793 = vmatpush1.msra.mxu0 0.0
  %794 = vmatprep.subr.mxu0 0.0
  %795 = vmatpush1.msra.mxu0 %v766
  %796 = vmatprep.subr.mxu0 0.0
  %797 = vmatpush1.msra.mxu0 %v765
  %798 = vmatprep.subr.mxu0 0.0
  %799 = vmatpush1.msra.mxu0 %v764
  %800 = vmatprep.subr.mxu0 0.0
  %801 = vmatpush1.msra.mxu0 %v763
  %802 = vmatprep.subr.mxu0 0.0
  %803 = vmatpush2.msra.mxu0 0.0
  %804 = vmatprep.subr.mxu0 0.0
  %805 = vmatpush2.msra.mxu0 0.0
  %806 = vmatprep.subr.mxu0 0.0
  %807 = vmatpush2.msra.mxu0 0.0
  %808 = vmatprep.subr.mxu0 0.0
  %809 = vmatpush2.msra.mxu0 0.0
  %810 = vmatprep.subr.mxu0 0.0
  %811 = vmatpush2.msra.mxu0 0.0
  %812 = vmatprep.subr.mxu0 0.0
  %813 = vmatpush2.msra.mxu0 0.0
  %814 = vmatprep.subr.mxu0 0.0
  %815 = vmatpush2.msra.mxu0 0.0
  %816 = vmatprep.subr.mxu0 0.0
  %817 = vmatpush2.msra.mxu0 0.0
  %818 = vmatprep.subr.mxu0 0.0
  %819 = vmatpush2.msra.mxu0 0.0
  %820 = vmatprep.subr.mxu0 0.0
  %821 = vmatpush2.msra.mxu0 0.0
  %822 = vmatprep.subr.mxu0 0.0
  %823 = vmatpush2.msra.mxu0 0.0
  %824 = vmatprep.subr.mxu0 0.0
  %825 = vmatpush2.msra.mxu0 0.0
  %826 = vmatprep.subr.mxu0 0.0
  %827 = vmatpush2.msra.mxu0 0.0
  %828 = vmatprep.subr.mxu0 0.0
  %829 = vmatpush2.msra.mxu0 0.0
  %830 = vmatprep.subr.mxu0 0.0
  %831 = vmatpush2.msra.mxu0 0.0
  %832 = vmatprep.subr.mxu0 0.0
  %833 = vmatpush2.msra.mxu0 0.0
  %834 = vmatprep.mubr.f32.mxu0 0.0
  %835 = vmatmul.mubr.f32.gmra.mxu0 %v768
  %v836 = vpop.f32.mrf.mxu0
  %v837 = vadd.f32 0.0, %v836
  %v838 = vpop.f32.mrf.mxu0
  %839 = vdwg.mxu0
  %v840 = vadd.f32 %v761, %v837
  %v841 = vxor.u32 %v840, 2147483648
  %v842 = vmul.f32 %v841, 1.442695
  %v843 = vpow.pop %v842
  %v844 = vadd.f32 %v843, 1.0
  %v845 = vrcp.pop %v844
  %v846 = vmul.f32 1.0, %v845
  %v847 = vld [vmem:[#allocation3] sm:$0x3]
  %849 = vrot.lane.b32.xlu0 %v847, 32
  %v850 = vpop.permute.xlu0 %849
  %v852 = vmul.f32 %v846, %v850
  %v853 = vtanh.pop %v840
  %855 = vrot.lane.b32.xlu0 %v853, 64
  %v856 = vpop.permute.xlu0 %855
  %v858 = vmul.f32 %v846, %v856
  %860 = vrot.lane.b32.xlu0 %v858, 32
  %v861 = vpop.permute.xlu0 %860
  %v863 = vadd.f32 %v852, %v861
  %v864 = vtanh.pop %v863
  %866 = vrot.lane.b32.xlu0 %v864, 64
  %v867 = vpop.permute.xlu0 %866
  %v869 = vmul.f32 %v846, %v867
  %871 = vrot.lane.b32.xlu0 %v869, 32
  %v872 = vpop.permute.xlu0 %871
  %874 = vst.msk [vmem:[#allocation2] sm:$0x3] %vm142, %v872
  %876 = vrot.lane.b32.xlu0 %v863, 96
  %v877 = vpop.permute.xlu0 %876
  %879 = vst.msk [vmem:[#allocation3] sm:$0x3] %vm142, %v877
  %s880 = scalar_lea.vmem %s4, 12
  %881 = vst.msk [vmem:[%s880] sm:$0x3] %vm142, %v872
  %s882 = scalar_lea.vmem %s0, 14
  %v883 = vld [vmem:[%s882] sm:$0x3]
  %v884 = vld [vmem:[#allocation2] sm:$0x3]
  %v885 = vld [vmem:[%s3] sm:$0xff]
  %v886 = vld [vmem:[%s3 + $0x8] sm:$0xff]
  %v887 = vld [vmem:[%s3 + $0x10] sm:$0xff]
  %v888 = vld [vmem:[%s3 + $0x18] sm:$0xff]
  %v890 = vsel %vm34, %v884, 0
  %892 = vmatprep.subr.mxu0 0.0
  %893 = vmatpush1.msra.mxu0 0.0
  %894 = vmatprep.subr.mxu0 0.0
  %895 = vmatpush1.msra.mxu0 0.0
  %896 = vmatprep.subr.mxu0 0.0
  %897 = vmatpush1.msra.mxu0 0.0
  %898 = vmatprep.subr.mxu0 0.0
  %899 = vmatpush1.msra.mxu0 0.0
  %900 = vmatprep.subr.mxu0 0.0
  %901 = vmatpush1.msra.mxu0 0.0
  %902 = vmatprep.subr.mxu0 0.0
  %903 = vmatpush1.msra.mxu0 0.0
  %904 = vmatprep.subr.mxu0 0.0
  %905 = vmatpush1.msra.mxu0 0.0
  %906 = vmatprep.subr.mxu0 0.0
  %907 = vmatpush1.msra.mxu0 0.0
  %908 = vmatprep.subr.mxu0 0.0
  %909 = vmatpush1.msra.mxu0 0.0
  %910 = vmatprep.subr.mxu0 0.0
  %911 = vmatpush1.msra.mxu0 0.0
  %912 = vmatprep.subr.mxu0 0.0
  %913 = vmatpush1.msra.mxu0 0.0
  %914 = vmatprep.subr.mxu0 0.0
  %915 = vmatpush1.msra.mxu0 0.0
  %916 = vmatprep.subr.mxu0 0.0
  %917 = vmatpush1.msra.mxu0 %v888
  %918 = vmatprep.subr.mxu0 0.0
  %919 = vmatpush1.msra.mxu0 %v887
  %920 = vmatprep.subr.mxu0 0.0
  %921 = vmatpush1.msra.mxu0 %v886
  %922 = vmatprep.subr.mxu0 0.0
  %923 = vmatpush1.msra.mxu0 %v885
  %924 = vmatprep.subr.mxu0 0.0
  %925 = vmatpush2.msra.mxu0 0.0
  %926 = vmatprep.subr.mxu0 0.0
  %927 = vmatpush2.msra.mxu0 0.0
  %928 = vmatprep.subr.mxu0 0.0
  %929 = vmatpush2.msra.mxu0 0.0
  %930 = vmatprep.subr.mxu0 0.0
  %931 = vmatpush2.msra.mxu0 0.0
  %932 = vmatprep.subr.mxu0 0.0
  %933 = vmatpush2.msra.mxu0 0.0
  %934 = vmatprep.subr.mxu0 0.0
  %935 = vmatpush2.msra.mxu0 0.0
  %936 = vmatprep.subr.mxu0 0.0
  %937 = vmatpush2.msra.mxu0 0.0
  %938 = vmatprep.subr.mxu0 0.0
  %939 = vmatpush2.msra.mxu0 0.0
  %940 = vmatprep.subr.mxu0 0.0
  %941 = vmatpush2.msra.mxu0 0.0
  %942 = vmatprep.subr.mxu0 0.0
  %943 = vmatpush2.msra.mxu0 0.0
  %944 = vmatprep.subr.mxu0 0.0
  %945 = vmatpush2.msra.mxu0 0.0
  %946 = vmatprep.subr.mxu0 0.0
  %947 = vmatpush2.msra.mxu0 0.0
  %948 = vmatprep.subr.mxu0 0.0
  %949 = vmatpush2.msra.mxu0 0.0
  %950 = vmatprep.subr.mxu0 0.0
  %951 = vmatpush2.msra.mxu0 0.0
  %952 = vmatprep.subr.mxu0 0.0
  %953 = vmatpush2.msra.mxu0 0.0
  %954 = vmatprep.subr.mxu0 0.0
  %955 = vmatpush2.msra.mxu0 0.0
  %956 = vmatprep.mubr.f32.mxu0 0.0
  %957 = vmatmul.mubr.f32.gmra.mxu0 %v890
  %v958 = vpop.f32.mrf.mxu0
  %v959 = vadd.f32 0.0, %v958
  %v960 = vpop.f32.mrf.mxu0
  %961 = vdwg.mxu0
  %v962 = vadd.f32 %v883, %v959
  %v963 = vxor.u32 %v962, 2147483648
  %v964 = vmul.f32 %v963, 1.442695
  %v965 = vpow.pop %v964
  %v966 = vadd.f32 %v965, 1.0
  %v967 = vrcp.pop %v966
  %v968 = vmul.f32 1.0, %v967
  %v969 = vld [vmem:[#allocation3] sm:$0x3]
  %971 = vrot.lane.b32.xlu0 %v969, 32
  %v972 = vpop.permute.xlu0 %971
  %v974 = vmul.f32 %v968, %v972
  %v975 = vtanh.pop %v962
  %977 = vrot.lane.b32.xlu0 %v975, 64
  %v978 = vpop.permute.xlu0 %977
  %v980 = vmul.f32 %v968, %v978
  %982 = vrot.lane.b32.xlu0 %v980, 32
  %v983 = vpop.permute.xlu0 %982
  %v985 = vadd.f32 %v974, %v983
  %v986 = vtanh.pop %v985
  %988 = vrot.lane.b32.xlu0 %v986, 64
  %v989 = vpop.permute.xlu0 %988
  %v991 = vmul.f32 %v968, %v989
  %993 = vrot.lane.b32.xlu0 %v991, 32
  %v994 = vpop.permute.xlu0 %993
  %996 = vst.msk [vmem:[#allocation2] sm:$0x3] %vm142, %v994
  %998 = vrot.lane.b32.xlu0 %v985, 96
  %v999 = vpop.permute.xlu0 %998
  %1001 = vst.msk [vmem:[#allocation3] sm:$0x3] %vm142, %v999
  %s1002 = scalar_lea.vmem %s4, 14
  %1003 = vst.msk [vmem:[%s1002] sm:$0x3] %vm142, %v994
  %v1004 = vld [vmem:[#allocation3] sm:$0x3]
  %1005 = vst.msk [vmem:[%s5] sm:$0x3] %vm142, %v1004
  // Predicated region
  $region22: #{sqapci_lstm_forward.2} parent=0 // pred_check
    _
  $region23: #{sqapci_lstm_forward.2} parent=0 // pred_check_branch
    %1007 = sbr.rel (0) target = $region25
  $region24: #{sqapci_lstm_forward.2} parent=0 // pred_region
    _
  $region25: #{sqapci_lstm_forward.2} parent=0 // pred_fallthru
    _
  // Predicated region
  $region26: #{sqapci_lstm_forward.2} parent=0 // pred_check
    _
  $region27: #{sqapci_lstm_forward.2} parent=0 // pred_check_branch
    %1009 = sbr.rel (0) target = $region29
  $region28: #{sqapci_lstm_forward.2} parent=0 // pred_region
    _
  $region29: #{sqapci_lstm_forward.2} parent=0 // pred_fallthru
    _
  // Predicated region
  $region30: #{sqapci_lstm_forward.2} parent=0 // pred_check
    _
  $region31: #{sqapci_lstm_forward.2} parent=0 // pred_check_branch
    %1011 = sbr.rel (0) target = $region33
  $region32: #{sqapci_lstm_forward.2} parent=0 // pred_region
    _
  $region33: #{sqapci_lstm_forward.2} parent=0 // pred_fallthru
    _
  // Predicated region
  $region34: #{sqapci_lstm_forward.2} parent=0 // pred_check
    _
  $region35: #{sqapci_lstm_forward.2} parent=0 // pred_check_branch
    %1013 = sbr.rel (0) target = $region37
  $region36: #{sqapci_lstm_forward.2} parent=0 // pred_region
    _
  $region37: #{sqapci_lstm_forward.2} parent=0 // pred_fallthru
    _

</llo_original>
